<compile_context>
chip_gen: v7x
topology: tpu7x:2x2x1
jax: 0.10.0
libtpu: 0.0.40
codegen_flags: <defaults>
</compile_context>

<pallas_src>
import functools

import jax
import jax.numpy as jnp
from jax import lax
from jax.experimental import pallas as pl
from jax.experimental.pallas import tpu as pltpu

_LANE = 128
_TARGET_ROWS = 2048          # target matmul rows (output pixels) per grid step


def _make_conv3x3_kernel(th, w, cin, nc):
    """Per-(image, row-tile) fused 3x3-conv kernel.

    Refs seen by the kernel:
      x_ref: (Hpad+2, W+2, Cin)  bf16  - whole zero-padded image (VMEM resident)
      w_ref: (9, Cin, Nc)        bf16  - one (Cin, Nc) weight slab per tap
      b_ref: (1, Nc)             f32   - bias (zero-padded to Nc)
      o_ref: (TH, W, Nc)         out dtype
    """

    def kernel(x_ref, w_ref, b_ref, o_ref):
        r0 = pl.program_id(1) * th
        if th % 8 == 0:
            r0 = pl.multiple_of(r0, 8)
        acc = jnp.zeros((th * w, nc), jnp.float32)
        # 9 accumulating MXU taps (dy, dx).  All slicing is VMEM-local, so the
        # "im2col" never touches HBM.
        for t in range(9):
            dy, dx = divmod(t, 3)
            a = x_ref[pl.ds(r0 + dy, th), dx:dx + w, :]          # (TH, W, Cin)
            acc = acc + jnp.dot(a.reshape(th * w, cin), w_ref[t],
                                preferred_element_type=jnp.float32)
        acc = acc + b_ref[...]                                    # f32 bias add
        o_ref[...] = acc.reshape(th, w, nc).astype(o_ref.dtype)

    return kernel


@functools.partial(jax.jit, static_argnames=("block_rows",))
def upsample_block_x3(x_nchw, w_oihw, bias, *, block_rows=None):
    """Conv2d(G0 -> 9*G0, k=3, s=1, p=1) + PixelShuffle(3); NCHW in / NCHW out."""
    N, Cin, H, W = x_nchw.shape
    Cout = w_oihw.shape[0]                      # 9 * G0
    r = 3
    G0 = Cout // (r * r)

    # ---- row tiling -------------------------------------------------------
    if block_rows is None:
        block_rows = max(1, _TARGET_ROWS // max(W, 1))
    TH = max(1, min(int(block_rows), H))
    n_row_tiles = pl.cdiv(H, TH)
    Ht = n_row_tiles * TH                       # H rounded up to the tile

    # ---- adaptive output-channel padding ----------------------------------
    # Lane-dense (multiple-of-128) stores only when the padding overhead is
    # small; tiny-G0 configs are bandwidth-bound and padding just inflates
    # HBM writes (e.g. 36 -> 128 would be ~3.5x).
    nc_pad = pl.cdiv(Cout, _LANE) * _LANE
    Nc = nc_pad if 4 * nc_pad <= 5 * Cout else Cout

    # ---- input: NCHW -> zero-padded NHWC, bf16 ----------------------------
    x_nhwc = jnp.transpose(x_nchw, (0, 2, 3, 1))                  # (N, H, W, Cin)
    x_pad = jnp.pad(x_nhwc, ((0, 0), (1, 1 + (Ht - H)), (1, 1), (0, 0)))
    x_pad = x_pad.astype(jnp.bfloat16)                            # (N, Ht+2, W+2, Cin)

    # ---- weights: OIHW -> (tap, Cin, Nc) bf16 ; bias -> (1, Nc) f32 --------
    w_taps = jnp.transpose(w_oihw, (2, 3, 1, 0)).reshape(9, Cin, Cout)
    w_taps = jnp.pad(w_taps, ((0, 0), (0, 0), (0, Nc - Cout))).astype(jnp.bfloat16)
    b2d = jnp.pad(bias.reshape(1, Cout), ((0, 0), (0, Nc - Cout))).astype(jnp.float32)

    out_dtype = x_nchw.dtype
    out_itemsize = jnp.dtype(out_dtype).itemsize
    kernel = _make_conv3x3_kernel(TH, W, Cin, Nc)

    flops = 2 * N * Ht * W * (9 * Cin) * Nc
    bytes_accessed = (x_pad.size * 2 + w_taps.size * 2 + b2d.size * 4
                      + N * Ht * W * Nc * out_itemsize)

    out = pl.pallas_call(
        kernel,
        out_shape=jax.ShapeDtypeStruct((N, Ht, W, Nc), out_dtype),
        grid_spec=pltpu.PrefetchScalarGridSpec(
            num_scalar_prefetch=0,
            grid=(N, n_row_tiles),
            in_specs=[
                # whole padded image, resident across the row-tile axis
                pl.BlockSpec((None, Ht + 2, W + 2, Cin), lambda n, i: (n, 0, 0, 0)),
                # resident weights / bias (constant index_map -> DMA'd once)
                pl.BlockSpec((9, Cin, Nc), lambda n, i: (0, 0, 0)),
                pl.BlockSpec((1, Nc), lambda n, i: (0, 0)),
            ],
            out_specs=pl.BlockSpec((None, TH, W, Nc), lambda n, i: (n, i, 0, 0)),
        ),
        compiler_params=pltpu.CompilerParams(
            dimension_semantics=("parallel", "parallel"),
            vmem_limit_bytes=64 * 1024 * 1024,
        ),
        cost_estimate=pl.CostEstimate(
            flops=flops, transcendentals=0, bytes_accessed=bytes_accessed),
    )(x_pad, w_taps, b2d)

    # ---- drop padding, PixelShuffle(3), back to NCHW (one XLA fusion) ------
    conv = out[:, :H, :, :Cout].reshape(N, H, W, G0, r, r)        # (n,h,w,c,i,j)
    out_nchw = jnp.transpose(conv, (0, 3, 1, 4, 2, 5))            # (n,c,h,i,w,j)
    return out_nchw.reshape(N, G0, r * H, r * W)


def _pixel_shuffle_x3(x_nchw):
    N, C, H, W = x_nchw.shape
    r = 3
    G0 = C // (r * r)
    x = x_nchw.reshape(N, G0, r, r, H, W)
    x = jnp.transpose(x, (0, 1, 4, 2, 5, 3))
    return x.reshape(N, G0, H * r, W * r)


def _reference(x_nchw, w_oihw, bias):
    """Pure-JAX f32 reference (lax conv + pixel shuffle)."""
    conv = lax.conv_general_dilated(
        x_nchw, w_oihw, window_strides=(1, 1), padding="SAME",
        dimension_numbers=("NCHW", "OIHW", "NCHW"))
    conv = conv + bias.reshape(1, -1, 1, 1)
    return _pixel_shuffle_x3(conv)


if __name__ == "__main__":
    G0 = 4
    N, H, W = 2, 16, 16

    key = jax.random.PRNGKey(0)
    kx, kw, kb = jax.random.split(key, 3)

    x = jax.random.normal(kx, (N, G0, H, W), dtype=jnp.float32)
    # Conv2d(G0, 9*G0, 3, padding=1) parameter shapes, PyTorch-style init.
    fan_in = G0 * 3 * 3
    bound = 1.0 / (fan_in ** 0.5)
    w = jax.random.uniform(kw, (9 * G0, G0, 3, 3), jnp.float32, -bound, bound)
    b = jax.random.uniform(kb, (9 * G0,), jnp.float32, -bound, bound)

    ref = jax.block_until_ready(_reference(x, w, b))

    # Multi-row-tile path (exercises the halo'd in-VMEM im2col across tiles).
    out = jax.block_until_ready(upsample_block_x3(x, w, b, block_rows=8))
    assert out.shape == (N, G0, 3 * H, 3 * W), out.shape
    assert jnp.allclose(out, ref, atol=5e-2, rtol=5e-2), \
        float(jnp.max(jnp.abs(out - ref)))

    # Default (auto) row-tile path.
    out2 = jax.block_until_ready(upsample_block_x3(x, w, b))
    assert jnp.allclose(out2, ref, atol=5e-2, rtol=5e-2), \
        float(jnp.max(jnp.abs(out2 - ref)))

    print("KERNEL_OK")
</pallas_src>

<mosaic_0001>
module attributes {stable_mosaic.version = 11 : i64} {
  func.func @kernel(%arg0: i32, %arg1: i32, %arg2: memref<1x18x18x4xbf16, #tpu.memory_space<vmem>>, %arg3: memref<9x4x36xbf16, #tpu.memory_space<vmem>>, %arg4: memref<1x36xf32, #tpu.memory_space<vmem>>, %arg5: memref<1x8x16x36xf32, #tpu.memory_space<vmem>>) attributes {dimension_semantics = [#tpu.dimension_semantics<parallel>, #tpu.dimension_semantics<parallel>], iteration_bounds = array<i64: 2, 2>, scalar_prefetch = 0 : i64, scratch_operands = 0 : i64, tpu.core_type = #tpu.core_type<tc>, window_params = [{transform_indices = @transform_0, window_bounds = array<i64: 1, 18, 18, 4>}, {pipeline_mode = #tpu.pipeline_mode<synchronous>, transform_indices = @transform_1, window_bounds = array<i64: 9, 4, 36>}, {pipeline_mode = #tpu.pipeline_mode<synchronous>, transform_indices = @transform_2, window_bounds = array<i64: 1, 36>}, {transform_indices = @transform_3, window_bounds = array<i64: 1, 8, 16, 36>}]} {
    %c8_i32 = arith.constant 8 : i32
    %0 = arith.muli %arg1, %c8_i32 : i32
    %1 = tpu.assume_multiple %0, 8 : i32
    %cst = arith.constant 0.000000e+00 : f32
    %2 = vector.broadcast %cst : f32 to vector<128x36xf32>
    %c0_i32 = arith.constant 0 : i32
    %3 = arith.addi %1, %c0_i32 : i32
    %c0 = arith.constant 0 : index
    %4 = arith.index_cast %3 : i32 to index
    %c0_0 = arith.constant 0 : index
    %c0_1 = arith.constant 0 : index
    %5 = vector.load %arg2[%c0, %4, %c0_0, %c0_1] : memref<1x18x18x4xbf16, #tpu.memory_space<vmem>>, vector<1x8x16x4xbf16>
    %6 = vector.shape_cast %5 : vector<1x8x16x4xbf16> to vector<8x16x4xbf16>
    %7 = vector.shape_cast %6 : vector<8x16x4xbf16> to vector<128x4xbf16>
    %c0_2 = arith.constant 0 : index
    %c0_3 = arith.constant 0 : index
    %c0_4 = arith.constant 0 : index
    %8 = vector.load %arg3[%c0_2, %c0_3, %c0_4] : memref<9x4x36xbf16, #tpu.memory_space<vmem>>, vector<1x4x36xbf16>
    %9 = vector.shape_cast %8 : vector<1x4x36xbf16> to vector<4x36xbf16>
    %cst_5 = arith.constant dense<0.000000e+00> : vector<128x36xf32>
    %10 = tpu.matmul %7, %9, %cst_5 {dimension_numbers = #tpu.dot_dimension_numbers<[1], [0], [0], [1], [0, 0, 1, 1], [], []>} : vector<128x4xbf16>, vector<4x36xbf16>, vector<128x36xf32> -> vector<128x36xf32>
    %11 = arith.addf %2, %10 : vector<128x36xf32>
    %c0_i32_6 = arith.constant 0 : i32
    %12 = arith.addi %1, %c0_i32_6 : i32
    %c0_7 = arith.constant 0 : index
    %13 = arith.index_cast %12 : i32 to index
    %c1 = arith.constant 1 : index
    %c0_8 = arith.constant 0 : index
    %14 = vector.load %arg2[%c0_7, %13, %c1, %c0_8] : memref<1x18x18x4xbf16, #tpu.memory_space<vmem>>, vector<1x8x16x4xbf16>
    %15 = vector.shape_cast %14 : vector<1x8x16x4xbf16> to vector<8x16x4xbf16>
    %16 = vector.shape_cast %15 : vector<8x16x4xbf16> to vector<128x4xbf16>
    %c1_9 = arith.constant 1 : index
    %c0_10 = arith.constant 0 : index
    %c0_11 = arith.constant 0 : index
    %17 = vector.load %arg3[%c1_9, %c0_10, %c0_11] : memref<9x4x36xbf16, #tpu.memory_space<vmem>>, vector<1x4x36xbf16>
    %18 = vector.shape_cast %17 : vector<1x4x36xbf16> to vector<4x36xbf16>
    %cst_12 = arith.constant dense<0.000000e+00> : vector<128x36xf32>
    %19 = tpu.matmul %16, %18, %cst_12 {dimension_numbers = #tpu.dot_dimension_numbers<[1], [0], [0], [1], [0, 0, 1, 1], [], []>} : vector<128x4xbf16>, vector<4x36xbf16>, vector<128x36xf32> -> vector<128x36xf32>
    %20 = arith.addf %11, %19 : vector<128x36xf32>
    %c0_i32_13 = arith.constant 0 : i32
    %21 = arith.addi %1, %c0_i32_13 : i32
    %c0_14 = arith.constant 0 : index
    %22 = arith.index_cast %21 : i32 to index
    %c2 = arith.constant 2 : index
    %c0_15 = arith.constant 0 : index
    %23 = vector.load %arg2[%c0_14, %22, %c2, %c0_15] : memref<1x18x18x4xbf16, #tpu.memory_space<vmem>>, vector<1x8x16x4xbf16>
    %24 = vector.shape_cast %23 : vector<1x8x16x4xbf16> to vector<8x16x4xbf16>
    %25 = vector.shape_cast %24 : vector<8x16x4xbf16> to vector<128x4xbf16>
    %c2_16 = arith.constant 2 : index
    %c0_17 = arith.constant 0 : index
    %c0_18 = arith.constant 0 : index
    %26 = vector.load %arg3[%c2_16, %c0_17, %c0_18] : memref<9x4x36xbf16, #tpu.memory_space<vmem>>, vector<1x4x36xbf16>
    %27 = vector.shape_cast %26 : vector<1x4x36xbf16> to vector<4x36xbf16>
    %cst_19 = arith.constant dense<0.000000e+00> : vector<128x36xf32>
    %28 = tpu.matmul %25, %27, %cst_19 {dimension_numbers = #tpu.dot_dimension_numbers<[1], [0], [0], [1], [0, 0, 1, 1], [], []>} : vector<128x4xbf16>, vector<4x36xbf16>, vector<128x36xf32> -> vector<128x36xf32>
    %29 = arith.addf %20, %28 : vector<128x36xf32>
    %c1_i32 = arith.constant 1 : i32
    %30 = arith.addi %1, %c1_i32 : i32
    %c0_20 = arith.constant 0 : index
    %31 = arith.index_cast %30 : i32 to index
    %c0_21 = arith.constant 0 : index
    %c0_22 = arith.constant 0 : index
    %32 = vector.load %arg2[%c0_20, %31, %c0_21, %c0_22] : memref<1x18x18x4xbf16, #tpu.memory_space<vmem>>, vector<1x8x16x4xbf16>
    %33 = vector.shape_cast %32 : vector<1x8x16x4xbf16> to vector<8x16x4xbf16>
    %34 = vector.shape_cast %33 : vector<8x16x4xbf16> to vector<128x4xbf16>
    %c3 = arith.constant 3 : index
    %c0_23 = arith.constant 0 : index
    %c0_24 = arith.constant 0 : index
    %35 = vector.load %arg3[%c3, %c0_23, %c0_24] : memref<9x4x36xbf16, #tpu.memory_space<vmem>>, vector<1x4x36xbf16>
    %36 = vector.shape_cast %35 : vector<1x4x36xbf16> to vector<4x36xbf16>
    %cst_25 = arith.constant dense<0.000000e+00> : vector<128x36xf32>
    %37 = tpu.matmul %34, %36, %cst_25 {dimension_numbers = #tpu.dot_dimension_numbers<[1], [0], [0], [1], [0, 0, 1, 1], [], []>} : vector<128x4xbf16>, vector<4x36xbf16>, vector<128x36xf32> -> vector<128x36xf32>
    %38 = arith.addf %29, %37 : vector<128x36xf32>
    %c1_i32_26 = arith.constant 1 : i32
    %39 = arith.addi %1, %c1_i32_26 : i32
    %c0_27 = arith.constant 0 : index
    %40 = arith.index_cast %39 : i32 to index
    %c1_28 = arith.constant 1 : index
    %c0_29 = arith.constant 0 : index
    %41 = vector.load %arg2[%c0_27, %40, %c1_28, %c0_29] : memref<1x18x18x4xbf16, #tpu.memory_space<vmem>>, vector<1x8x16x4xbf16>
    %42 = vector.shape_cast %41 : vector<1x8x16x4xbf16> to vector<8x16x4xbf16>
    %43 = vector.shape_cast %42 : vector<8x16x4xbf16> to vector<128x4xbf16>
    %c4 = arith.constant 4 : index
    %c0_30 = arith.constant 0 : index
    %c0_31 = arith.constant 0 : index
    %44 = vector.load %arg3[%c4, %c0_30, %c0_31] : memref<9x4x36xbf16, #tpu.memory_space<vmem>>, vector<1x4x36xbf16>
    %45 = vector.shape_cast %44 : vector<1x4x36xbf16> to vector<4x36xbf16>
    %cst_32 = arith.constant dense<0.000000e+00> : vector<128x36xf32>
    %46 = tpu.matmul %43, %45, %cst_32 {dimension_numbers = #tpu.dot_dimension_numbers<[1], [0], [0], [1], [0, 0, 1, 1], [], []>} : vector<128x4xbf16>, vector<4x36xbf16>, vector<128x36xf32> -> vector<128x36xf32>
    %47 = arith.addf %38, %46 : vector<128x36xf32>
    %c1_i32_33 = arith.constant 1 : i32
    %48 = arith.addi %1, %c1_i32_33 : i32
    %c0_34 = arith.constant 0 : index
    %49 = arith.index_cast %48 : i32 to index
    %c2_35 = arith.constant 2 : index
    %c0_36 = arith.constant 0 : index
    %50 = vector.load %arg2[%c0_34, %49, %c2_35, %c0_36] : memref<1x18x18x4xbf16, #tpu.memory_space<vmem>>, vector<1x8x16x4xbf16>
    %51 = vector.shape_cast %50 : vector<1x8x16x4xbf16> to vector<8x16x4xbf16>
    %52 = vector.shape_cast %51 : vector<8x16x4xbf16> to vector<128x4xbf16>
    %c5 = arith.constant 5 : index
    %c0_37 = arith.constant 0 : index
    %c0_38 = arith.constant 0 : index
    %53 = vector.load %arg3[%c5, %c0_37, %c0_38] : memref<9x4x36xbf16, #tpu.memory_space<vmem>>, vector<1x4x36xbf16>
    %54 = vector.shape_cast %53 : vector<1x4x36xbf16> to vector<4x36xbf16>
    %cst_39 = arith.constant dense<0.000000e+00> : vector<128x36xf32>
    %55 = tpu.matmul %52, %54, %cst_39 {dimension_numbers = #tpu.dot_dimension_numbers<[1], [0], [0], [1], [0, 0, 1, 1], [], []>} : vector<128x4xbf16>, vector<4x36xbf16>, vector<128x36xf32> -> vector<128x36xf32>
    %56 = arith.addf %47, %55 : vector<128x36xf32>
    %c2_i32 = arith.constant 2 : i32
    %57 = arith.addi %1, %c2_i32 : i32
    %c0_40 = arith.constant 0 : index
    %58 = arith.index_cast %57 : i32 to index
    %c0_41 = arith.constant 0 : index
    %c0_42 = arith.constant 0 : index
    %59 = vector.load %arg2[%c0_40, %58, %c0_41, %c0_42] : memref<1x18x18x4xbf16, #tpu.memory_space<vmem>>, vector<1x8x16x4xbf16>
    %60 = vector.shape_cast %59 : vector<1x8x16x4xbf16> to vector<8x16x4xbf16>
    %61 = vector.shape_cast %60 : vector<8x16x4xbf16> to vector<128x4xbf16>
    %c6 = arith.constant 6 : index
    %c0_43 = arith.constant 0 : index
    %c0_44 = arith.constant 0 : index
    %62 = vector.load %arg3[%c6, %c0_43, %c0_44] : memref<9x4x36xbf16, #tpu.memory_space<vmem>>, vector<1x4x36xbf16>
    %63 = vector.shape_cast %62 : vector<1x4x36xbf16> to vector<4x36xbf16>
    %cst_45 = arith.constant dense<0.000000e+00> : vector<128x36xf32>
    %64 = tpu.matmul %61, %63, %cst_45 {dimension_numbers = #tpu.dot_dimension_numbers<[1], [0], [0], [1], [0, 0, 1, 1], [], []>} : vector<128x4xbf16>, vector<4x36xbf16>, vector<128x36xf32> -> vector<128x36xf32>
    %65 = arith.addf %56, %64 : vector<128x36xf32>
    %c2_i32_46 = arith.constant 2 : i32
    %66 = arith.addi %1, %c2_i32_46 : i32
    %c0_47 = arith.constant 0 : index
    %67 = arith.index_cast %66 : i32 to index
    %c1_48 = arith.constant 1 : index
    %c0_49 = arith.constant 0 : index
    %68 = vector.load %arg2[%c0_47, %67, %c1_48, %c0_49] : memref<1x18x18x4xbf16, #tpu.memory_space<vmem>>, vector<1x8x16x4xbf16>
    %69 = vector.shape_cast %68 : vector<1x8x16x4xbf16> to vector<8x16x4xbf16>
    %70 = vector.shape_cast %69 : vector<8x16x4xbf16> to vector<128x4xbf16>
    %c7 = arith.constant 7 : index
    %c0_50 = arith.constant 0 : index
    %c0_51 = arith.constant 0 : index
    %71 = vector.load %arg3[%c7, %c0_50, %c0_51] : memref<9x4x36xbf16, #tpu.memory_space<vmem>>, vector<1x4x36xbf16>
    %72 = vector.shape_cast %71 : vector<1x4x36xbf16> to vector<4x36xbf16>
    %cst_52 = arith.constant dense<0.000000e+00> : vector<128x36xf32>
    %73 = tpu.matmul %70, %72, %cst_52 {dimension_numbers = #tpu.dot_dimension_numbers<[1], [0], [0], [1], [0, 0, 1, 1], [], []>} : vector<128x4xbf16>, vector<4x36xbf16>, vector<128x36xf32> -> vector<128x36xf32>
    %74 = arith.addf %65, %73 : vector<128x36xf32>
    %c2_i32_53 = arith.constant 2 : i32
    %75 = arith.addi %1, %c2_i32_53 : i32
    %c0_54 = arith.constant 0 : index
    %76 = arith.index_cast %75 : i32 to index
    %c2_55 = arith.constant 2 : index
    %c0_56 = arith.constant 0 : index
    %77 = vector.load %arg2[%c0_54, %76, %c2_55, %c0_56] : memref<1x18x18x4xbf16, #tpu.memory_space<vmem>>, vector<1x8x16x4xbf16>
    %78 = vector.shape_cast %77 : vector<1x8x16x4xbf16> to vector<8x16x4xbf16>
    %79 = vector.shape_cast %78 : vector<8x16x4xbf16> to vector<128x4xbf16>
    %c8 = arith.constant 8 : index
    %c0_57 = arith.constant 0 : index
    %c0_58 = arith.constant 0 : index
    %80 = vector.load %arg3[%c8, %c0_57, %c0_58] : memref<9x4x36xbf16, #tpu.memory_space<vmem>>, vector<1x4x36xbf16>
    %81 = vector.shape_cast %80 : vector<1x4x36xbf16> to vector<4x36xbf16>
    %cst_59 = arith.constant dense<0.000000e+00> : vector<128x36xf32>
    %82 = tpu.matmul %79, %81, %cst_59 {dimension_numbers = #tpu.dot_dimension_numbers<[1], [0], [0], [1], [0, 0, 1, 1], [], []>} : vector<128x4xbf16>, vector<4x36xbf16>, vector<128x36xf32> -> vector<128x36xf32>
    %83 = arith.addf %74, %82 : vector<128x36xf32>
    %c0_60 = arith.constant 0 : index
    %c0_61 = arith.constant 0 : index
    %84 = vector.load %arg4[%c0_60, %c0_61] : memref<1x36xf32, #tpu.memory_space<vmem>>, vector<1x36xf32>
    %85 = vector.broadcast %84 : vector<1x36xf32> to vector<128x36xf32>
    %86 = arith.addf %83, %85 : vector<128x36xf32>
    %87 = vector.shape_cast %86 : vector<128x36xf32> to vector<8x16x36xf32>
    %c0_62 = arith.constant 0 : index
    %c0_63 = arith.constant 0 : index
    %c0_64 = arith.constant 0 : index
    %c0_65 = arith.constant 0 : index
    %88 = vector.load %arg5[%c0_62, %c0_63, %c0_64, %c0_65] : memref<1x8x16x36xf32, #tpu.memory_space<vmem>>, vector<1x8x16x36xf32>
    %89 = vector.shape_cast %88 : vector<1x8x16x36xf32> to vector<8x16x36xf32>
    %90 = vector.shape_cast %87 : vector<8x16x36xf32> to vector<1x8x16x36xf32>
    tpu.vector_store %arg5[%c0_62, %c0_63, %c0_64, %c0_65], %90 {strides = array<i32>} : memref<1x8x16x36xf32, #tpu.memory_space<vmem>>, vector<1x8x16x36xf32>,
    return
  }
  func.func @transform_0(%arg0: i32, %arg1: i32) -> (i32, i32, i32, i32) {
    %c0_i32 = arith.constant 0 : i32
    %c0_i32_0 = arith.constant 0 : i32
    %c0_i32_1 = arith.constant 0 : i32
    %c0_i32_2 = arith.constant 0 : i32
    return %arg0, %c0_i32, %c0_i32_0, %c0_i32_1 : i32, i32, i32, i32
  }
  func.func @transform_1(%arg0: i32, %arg1: i32) -> (i32, i32, i32) {
    %c0_i32 = arith.constant 0 : i32
    %c0_i32_0 = arith.constant 0 : i32
    %c0_i32_1 = arith.constant 0 : i32
    %c0_i32_2 = arith.constant 0 : i32
    return %c0_i32, %c0_i32_0, %c0_i32_1 : i32, i32, i32
  }
  func.func @transform_2(%arg0: i32, %arg1: i32) -> (i32, i32) {
    %c0_i32 = arith.constant 0 : i32
    %c0_i32_0 = arith.constant 0 : i32
    %c0_i32_1 = arith.constant 0 : i32
    return %c0_i32, %c0_i32_0 : i32, i32
  }
  func.func @transform_3(%arg0: i32, %arg1: i32) -> (i32, i32, i32, i32) {
    %c0_i32 = arith.constant 0 : i32
    %c0_i32_0 = arith.constant 0 : i32
    %c0_i32_1 = arith.constant 0 : i32
    return %arg0, %arg1, %c0_i32, %c0_i32_0 : i32, i32, i32, i32
  }
}

</mosaic_0001>

<llo_original>
// kernel: upsample_block_x3.1
$region0: #{upsample_block_x3.1}
  #allocation0 [shape = 'u32[]', space=smem, size = 0x4, offset = 0x4, fixed_abs, tag = 'smem constant byte address 0x4 - core index']
  #allocation1 [shape = 'u32[144,128]{1,0:T(1,128)}', space=vmem, size = 0x12000, scoped, tag = 'internal scratch']
  %s0 = inlined_call_operand.hbm [shape: bf16[2,18,18,4], index: 0, kind: input, shape index: {}]
  %s1 = inlined_call_operand.hbm [shape: bf16[9,4,36], index: 1, kind: input, shape index: {}]
  %s2 = inlined_call_operand.hbm [shape: f32[1,36], index: 2, kind: input, shape index: {}]
  %s3 = inlined_call_operand.hbm [shape: f32[2,16,16,36], index: 3, kind: output, shape index: {}]
  %s4 = sld [smem:[#allocation0]]
  $region57: #{upsample_block_x3.1} parent=0
    _
  %s6 = ssub.s32 1, %s4
  %s7 = scalar_select 0, %s6, %s4
  $region1: #{upsample_block_x3.1} parent=0
    #allocation2 [shape = 'u8[221184]{0}', space=vmem, size = 0x36000, scoped, tag = 'input window, operand 0']
    #allocation3 [shape = 's32[2]{0}', space=sflag, size = 0x8, scoped, tag = 'scoped memory for upsample_block_x3.1']
    #allocation4 [shape = 's32[2]{0}', space=sflag, size = 0x8, scoped, tag = 'scoped memory for upsample_block_x3.1']
    #allocation5 [shape = 'u8[9216]{0}', space=vmem, size = 0x2400, scoped, tag = 'input window, operand 1, single buffered']
    #allocation6 [shape = 's32[1]{0}', space=sflag, size = 0x4, scoped, tag = 'scoped memory for upsample_block_x3.1']
    #allocation7 [shape = 'u8[512]{0}', space=vmem, size = 0x400, scoped, tag = 'input window, operand 2, single buffered']
    #allocation8 [shape = 'u8[131072]{0}', space=vmem, size = 0x20000, scoped, tag = 'output window, operand 0']
    %8 = vsyncpa [#allocation3], 0
    %s9 = scalar_lea.sflag [#allocation3], 1
    %10 = vsyncpa %s9, 0
    %11 = vsyncpa [#allocation6], 0
    %12 = vsyncpa [#allocation4], 0
    %s13 = scalar_lea.sflag [#allocation4], 1
    %14 = vsyncpa %s13, 0
    loop: start=0, step=1, limit=6
    $region2: #{upsample_block_x3.1} parent=1 // loop_pre_header
      _
    $region3: #{upsample_block_x3.1} parent=1 // loop_header
      %s16 = sphi 0, %s20
      %p17 = scmp.ge.s32.totalorder %s16, 6
      %s23 = sphi 0, %s35
      %s24 = sphi 0, %s31
      %s25 = sphi 0, %s23
      %s26 = sphi 0, %s24
      %s27 = sphi 0, %s25
      %s28 = sphi 0, %s26
      %s38 = sphi 0, %s40
      %s41 = sphi 0, %s38
      %s42 = sphi 0, %s41
      %s58 = sphi 0, %s42
      %s62 = sphi 0, %s62
      %s64 = sphi 0, %s62
      %s65 = sphi 0, %s64
      %s79 = sphi 0, %s65
      %s83 = sphi 0, %s83
      %s85 = sphi 0, %s83
      %s86 = sphi 0, %s85
      %s100 = sphi 0, %s86
      %s108 = sphi 0, %s110
      %s111 = sphi 0, %s108
      %s112 = sphi 0, %s111
      %s128 = sphi 0, %s112
    $region4: #{upsample_block_x3.1} parent=1 // loop_header_branch
      %19 = sbr.rel (%p17) target = $region8
    $region5: #{upsample_block_x3.1} parent=1 // loop_body
      %s21 = ssub.s32 %s16, 1
      %s22 = ssub.s32 %s16, 2
      %s29 = sadd.s32 1, %s24
      %p30 = scmp.ge.s32.totalorder %s29, 2
      %s31 = scalar_select %p30, 0, %s29
      %s32 = sadd.s32 1, %s23
      %s33 = scalar_select %p30, %s32, %s23
      %p34 = scmp.ge.s32.totalorder %s33, 2
      %s35 = scalar_select %p34, 0, %s33
      %s36 = ssub.s32 %s23, %s35
      %p37 = scmp.eq.s32.totalorder %s36, 0
      %s39 = sadd.s32 %s38, 1
      %s40 = scalar_select %p37, %s38, %s39
      %p43 = pneg %p37
      %p44 = scmp.eq.s32.totalorder %s16, 3
      %p45 = por %p43, %p44
      %p46 = scmp.ne.s32.totalorder %s38, %s41
      %p47 = scmp.eq.s32.totalorder %s16, 0
      %p48 = por %p46, %p47
      %p49 = scmp.ne.s32.totalorder %s38, %s41
      %p50 = scmp.eq.s32.totalorder %s21, 3
      %p51 = por %p49, %p50
      %p52 = scmp.ne.s32.totalorder %s41, %s42
      %p53 = scmp.eq.s32.totalorder %s21, 0
      %p54 = por %p52, %p53
      %p55 = scmp.ne.s32.totalorder %s41, %s42
      %p56 = scmp.eq.s32.totalorder %s22, 3
      %p57 = por %p55, %p56
      %p59 = scmp.ne.s32.totalorder %s42, %s58
      %p60 = scmp.eq.s32.totalorder %s22, 0
      %p61 = por %p59, %p60
      %s63 = sadd.s32 %s62, 1
      %p66 = scmp.eq.s32.totalorder %s16, 3
      %p67 = scmp.ne.s32.totalorder %s62, %s64
      %p68 = scmp.eq.s32.totalorder %s16, 0
      %p69 = por %p67, %p68
      %p70 = scmp.ne.s32.totalorder %s62, %s64
      %p71 = scmp.eq.s32.totalorder %s21, 3
      %p72 = por %p70, %p71
      %p73 = scmp.ne.s32.totalorder %s64, %s65
      %p74 = scmp.eq.s32.totalorder %s21, 0
      %p75 = por %p73, %p74
      %p76 = scmp.ne.s32.totalorder %s64, %s65
      %p77 = scmp.eq.s32.totalorder %s22, 3
      %p78 = por %p76, %p77
      %p80 = scmp.ne.s32.totalorder %s65, %s79
      %p81 = scmp.eq.s32.totalorder %s22, 0
      %p82 = por %p80, %p81
      %s84 = sadd.s32 %s83, 1
      %p87 = scmp.eq.s32.totalorder %s16, 3
      %p88 = scmp.ne.s32.totalorder %s83, %s85
      %p89 = scmp.eq.s32.totalorder %s16, 0
      %p90 = por %p88, %p89
      %p91 = scmp.ne.s32.totalorder %s83, %s85
      %p92 = scmp.eq.s32.totalorder %s21, 3
      %p93 = por %p91, %p92
      %p94 = scmp.ne.s32.totalorder %s85, %s86
      %p95 = scmp.eq.s32.totalorder %s21, 0
      %p96 = por %p94, %p95
      %p97 = scmp.ne.s32.totalorder %s85, %s86
      %p98 = scmp.eq.s32.totalorder %s22, 3
      %p99 = por %p97, %p98
      %p101 = scmp.ne.s32.totalorder %s86, %s100
      %p102 = scmp.eq.s32.totalorder %s22, 0
      %p103 = por %p101, %p102
      %s104 = ssub.s32 %s23, %s35
      %s105 = ssub.s32 %s24, %s31
      %s106 = sor.u32 %s104, %s105
      %p107 = scmp.eq.s32.totalorder %s106, 0
      %s109 = sadd.s32 %s108, 1
      %s110 = scalar_select %p107, %s108, %s109
      %p113 = pneg %p107
      %p114 = scmp.eq.s32.totalorder %s16, 3
      %p115 = por %p113, %p114
      %p116 = scmp.ne.s32.totalorder %s108, %s111
      %p117 = scmp.eq.s32.totalorder %s16, 0
      %p118 = por %p116, %p117
      %p119 = scmp.ne.s32.totalorder %s108, %s111
      %p120 = scmp.eq.s32.totalorder %s21, 3
      %p121 = por %p119, %p120
      %p122 = scmp.ne.s32.totalorder %s111, %s112
      %p123 = scmp.eq.s32.totalorder %s21, 0
      %p124 = por %p122, %p123
      %p125 = scmp.ne.s32.totalorder %s111, %s112
      %p126 = scmp.eq.s32.totalorder %s22, 3
      %p127 = por %p125, %p126
      %p129 = scmp.ne.s32.totalorder %s112, %s128
      %p130 = scmp.eq.s32.totalorder %s22, 0
      %p131 = por %p129, %p130
      %p132 = scmp.le.s32.totalorder 1, %s16
      %p133 = scmp.lt.s32.totalorder %s16, 5
      %p134 = pnand %p132, %p133
      %p135 = pneg %p134
      // Predicated region
      $region9: #{upsample_block_x3.1} parent=5 // pred_check
        _
      $region10: #{upsample_block_x3.1} parent=5 // pred_check_branch
        %137 = sbr.rel (%p134) target = $region12
      $region11: #{upsample_block_x3.1} parent=5 // pred_region
        %s138 = ssub.s32 %s16, 1
        // Predicated region
        $region13: #{upsample_block_x3.1} parent=11 // pred_check
          %p139 = pneg %p75
        $region14: #{upsample_block_x3.1} parent=11 // pred_check_branch
          %141 = sbr.rel (%p139) target = $region16
        $region15: #{upsample_block_x3.1} parent=11 // pred_region
          %s143 = ssub.s32 288, 288
          %144 = vsyncadd [#allocation6], %s143
          %s145 = sshll.u32 [#allocation5], 4
          %s146 = int_to_ptr.vmem [resolvable:$true] %s145
          %151 = dma.hbm_to_vmem [thread:$0]  %s1, 288, %s146, [#allocation6], 32, 32, 2
        $region16: #{upsample_block_x3.1} parent=11 // pred_fallthru
          _
        // Predicated region
        $region17: #{upsample_block_x3.1} parent=11 // pred_check
          %p152 = pneg %p96
        $region18: #{upsample_block_x3.1} parent=11 // pred_check_branch
          %154 = sbr.rel (%p152) target = $region20
        $region19: #{upsample_block_x3.1} parent=11 // pred_region
          %s156 = ssub.s32 16, 16
          %157 = vsyncadd [#allocation6], %s156
          %s159 = sshll.u32 [#allocation7], 4
          %s160 = int_to_ptr.vmem [resolvable:$true] %s159
          %162 = dma.hbm_to_vmem [thread:$0]  %s2, 16, %s160, [#allocation6]
        $region20: #{upsample_block_x3.1} parent=11 // pred_fallthru
          _
      $region12: #{upsample_block_x3.1} parent=5 // pred_fallthru
        _
      %p163 = scmp.lt.s32.totalorder %s16, 4
      // Predicated region
      $region21: #{upsample_block_x3.1} parent=5 // pred_check
        %p164 = pneg %p163
      $region22: #{upsample_block_x3.1} parent=5 // pred_check_branch
        %166 = sbr.rel (%p164) target = $region24
      $region23: #{upsample_block_x3.1} parent=5 // pred_region
        // Predicated region
        $region25: #{upsample_block_x3.1} parent=23 // pred_check
          %p167 = pneg %p48
        $region26: #{upsample_block_x3.1} parent=23 // pred_check_branch
          %169 = sbr.rel (%p167) target = $region28
        $region27: #{upsample_block_x3.1} parent=23 // pred_region
          %s170 = sand.u32 %s38, 1
          %s171 = scalar_lea.sflag [#allocation3], %s170
          %s172 = sand.u32 %s38, 1
          %s173 = smul.addr %s172, 216
          %s174 = scalar_lea.vmem [#allocation2], %s173
          %s176 = ssub.s32 3456, 3456
          %177 = vsyncadd %s171, %s176
          %s178 = smul.addr %s23, 54
          %s179 = smul.addr %s178, 64
          %s180 = scalar_lea.hbm %s0, %s179
          %s181 = sshll.u32 %s174, 4
          %s182 = int_to_ptr.vmem [resolvable:$true] %s181
          %187 = dma.hbm_to_vmem [thread:$0]  %s180, 3456, %s182, %s171, 64, 64, 4
        $region28: #{upsample_block_x3.1} parent=23 // pred_fallthru
          _
      $region24: #{upsample_block_x3.1} parent=5 // pred_fallthru
        _
      %p188 = scmp.le.s32.totalorder 1, %s16
      %p189 = scmp.lt.s32.totalorder %s16, 5
      %p190 = pnand %p188, %p189
      %p191 = pneg %p190
      // Predicated region
      $region29: #{upsample_block_x3.1} parent=5 // pred_check
        _
      $region30: #{upsample_block_x3.1} parent=5 // pred_check_branch
        %193 = sbr.rel (%p190) target = $region32
      $region31: #{upsample_block_x3.1} parent=5 // pred_region
        %s194 = ssub.s32 %s16, 1
        %s195 = sand.u32 %s41, 1
        %s196 = scalar_lea.sflag [#allocation3], %s195
        %s197 = sand.u32 %s41, 1
        %s198 = smul.addr %s197, 216
        %s199 = scalar_lea.vmem [#allocation2], %s198
        // Predicated region
        $region33: #{upsample_block_x3.1} parent=31 // pred_check
          %p200 = pneg %p54
        $region34: #{upsample_block_x3.1} parent=31 // pred_check_branch
          %202 = sbr.rel (%p200) target = $region36
        $region35: #{upsample_block_x3.1} parent=31 // pred_region
          %203 = dma.done %s196, 3456
        $region36: #{upsample_block_x3.1} parent=31 // pred_fallthru
          _
        // Predicated region
        $region37: #{upsample_block_x3.1} parent=31 // pred_check
          %p204 = pneg %p75
        $region38: #{upsample_block_x3.1} parent=31 // pred_check_branch
          %206 = sbr.rel (%p204) target = $region40
        $region39: #{upsample_block_x3.1} parent=31 // pred_region
          %207 = dma.done [#allocation6], 288
        $region40: #{upsample_block_x3.1} parent=31 // pred_fallthru
          _
        // Predicated region
        $region41: #{upsample_block_x3.1} parent=31 // pred_check
          %p208 = pneg %p96
        $region42: #{upsample_block_x3.1} parent=31 // pred_check_branch
          %210 = sbr.rel (%p208) target = $region44
        $region43: #{upsample_block_x3.1} parent=31 // pred_region
          %211 = dma.done [#allocation6], 16
        $region44: #{upsample_block_x3.1} parent=31 // pred_fallthru
          _
        %s212 = sand.u32 %s41, 1
        %s213 = scalar_lea.sflag [#allocation3], %s212
        %s214 = sand.u32 %s41, 1
        %s215 = smul.addr %s214, 216
        %s216 = scalar_lea.vmem [#allocation2], %s215
        %p217 = pneg %p54
        %p218 = pneg %p51
        %p219 = pneg %p75
        %p220 = pneg %p72
        %p221 = pneg %p96
        %p222 = pneg %p93
        %p223 = pneg %p124
        %p224 = pneg %p121
        %s225 = sand.u32 %s111, 1
        %s226 = scalar_lea.sflag [#allocation4], %s225
        %s227 = sand.u32 %s111, 1
        %s228 = smul.addr %s227, 128
        %s229 = scalar_lea.vmem [#allocation8], %s228
        %s230 = smul.u32 8, %s26
        %s232 = smul.u32 %s26, 8
        %s233 = smul.u32 %s232, 3
        %s234 = smul.addr %s233, 4
        %s235 = scalar_lea.vmem %s199, %s234 [#allocation2]
        %v236 = vld [vmem:[%s235] sm:$0xf]
        %v237 = vld [vmem:[%s235 + $0x4] sm:$0xf]
        %v238 = vld [vmem:[%s235 + $0xc] sm:$0xf]
        %v239 = vld [vmem:[%s235 + $0x10] sm:$0xf]
        %v240 = vld [vmem:[%s235 + $0x18] sm:$0xf]
        %v241 = vld [vmem:[%s235 + $0x1c] sm:$0xf]
        %v242 = vld [vmem:[%s235 + $0x24] sm:$0xf]
        %v243 = vld [vmem:[%s235 + $0x28] sm:$0xf]
        %v244 = vld [vmem:[%s235 + $0x30] sm:$0xf]
        %v245 = vld [vmem:[%s235 + $0x34] sm:$0xf]
        %v246 = vld [vmem:[%s235 + $0x3c] sm:$0xf]
        %v247 = vld [vmem:[%s235 + $0x40] sm:$0xf]
        %v248 = vld [vmem:[%s235 + $0x48] sm:$0xf]
        %v249 = vld [vmem:[%s235 + $0x4c] sm:$0xf]
        %v250 = vld [vmem:[%s235 + $0x54] sm:$0xf]
        %v251 = vld [vmem:[%s235 + $0x58] sm:$0xf]
        %v252 = vld [vmem:[#allocation5] sm:$0x3]
        %v253 = vld [vmem:[%s235 + $0x8] sm:$0x1]
        %v254 = vld [vmem:[%s235 + $0x14] sm:$0x1]
        %v255 = vld [vmem:[%s235 + $0x20] sm:$0x1]
        %v256 = vld [vmem:[%s235 + $0x2c] sm:$0x1]
        %v257 = vld [vmem:[%s235 + $0x38] sm:$0x1]
        %v258 = vld [vmem:[%s235 + $0x44] sm:$0x1]
        %v259 = vld [vmem:[%s235 + $0x50] sm:$0x1]
        %v260 = vld [vmem:[%s235 + $0x5c] sm:$0x1]
        %vm261 = vsmask.f32 3328
        %vm262 = vsmask.f32 7440
        %vm263 = vmor %vm261, %vm262
        %v265 = vshrl.u32 %v236, 16
        %v267 = vrot.slane %v265, 4
        %v268 = vshll.u32 %v236, 16
        %v270 = vrot.slane %v268, 5
        %v271 = vor.u32 %v267, %v270
        %v272 = vrot.slane %v271, 4
        %v274 = vshll.u32 %v237, 16
        %v276 = vrot.slane %v274, 5
        %v277 = vsel %vm263, %v272, %v276
        %v278 = vshrl.u32 %v237, 16
        %v280 = vrot.slane %v278, 4
        %v281 = vor.u32 %v280, %v276
        %v282 = vrot.slane %v281, 4
        %v284 = vshll.u32 %v253, 16
        %v286 = vrot.slane %v284, 5
        %v287 = vsel %vm263, %v282, %v286
        %v289 = vshrl.u32 %v238, 16
        %v291 = vrot.slane %v289, 4
        %v292 = vshll.u32 %v238, 16
        %v294 = vrot.slane %v292, 5
        %v295 = vor.u32 %v291, %v294
        %v296 = vrot.slane %v295, 4
        %v298 = vshll.u32 %v239, 16
        %v300 = vrot.slane %v298, 5
        %v301 = vsel %vm263, %v296, %v300
        %v302 = vshrl.u32 %v239, 16
        %v304 = vrot.slane %v302, 4
        %v305 = vor.u32 %v304, %v300
        %v306 = vrot.slane %v305, 4
        %v308 = vshll.u32 %v254, 16
        %v310 = vrot.slane %v308, 5
        %v311 = vsel %vm263, %v306, %v310
        %v313 = vshrl.u32 %v240, 16
        %v315 = vrot.slane %v313, 4
        %v316 = vshll.u32 %v240, 16
        %v318 = vrot.slane %v316, 5
        %v319 = vor.u32 %v315, %v318
        %v320 = vrot.slane %v319, 4
        %v322 = vshll.u32 %v241, 16
        %v324 = vrot.slane %v322, 5
        %v325 = vsel %vm263, %v320, %v324
        %v326 = vshrl.u32 %v241, 16
        %v328 = vrot.slane %v326, 4
        %v329 = vor.u32 %v328, %v324
        %v330 = vrot.slane %v329, 4
        %v332 = vshll.u32 %v255, 16
        %v334 = vrot.slane %v332, 5
        %v335 = vsel %vm263, %v330, %v334
        %v337 = vshrl.u32 %v242, 16
        %v339 = vrot.slane %v337, 4
        %v340 = vshll.u32 %v242, 16
        %v342 = vrot.slane %v340, 5
        %v343 = vor.u32 %v339, %v342
        %v344 = vrot.slane %v343, 4
        %v346 = vshll.u32 %v243, 16
        %v348 = vrot.slane %v346, 5
        %v349 = vsel %vm263, %v344, %v348
        %v350 = vshrl.u32 %v243, 16
        %v352 = vrot.slane %v350, 4
        %v353 = vor.u32 %v352, %v348
        %v354 = vrot.slane %v353, 4
        %v356 = vshll.u32 %v256, 16
        %v358 = vrot.slane %v356, 5
        %v359 = vsel %vm263, %v354, %v358
        %v361 = vshrl.u32 %v244, 16
        %v363 = vrot.slane %v361, 4
        %v364 = vshll.u32 %v244, 16
        %v366 = vrot.slane %v364, 5
        %v367 = vor.u32 %v363, %v366
        %v368 = vrot.slane %v367, 4
        %v370 = vshll.u32 %v245, 16
        %v372 = vrot.slane %v370, 5
        %v373 = vsel %vm263, %v368, %v372
        %v374 = vshrl.u32 %v245, 16
        %v376 = vrot.slane %v374, 4
        %v377 = vor.u32 %v376, %v372
        %v378 = vrot.slane %v377, 4
        %v380 = vshll.u32 %v257, 16
        %v382 = vrot.slane %v380, 5
        %v383 = vsel %vm263, %v378, %v382
        %v385 = vshrl.u32 %v246, 16
        %v387 = vrot.slane %v385, 4
        %v388 = vshll.u32 %v246, 16
        %v390 = vrot.slane %v388, 5
        %v391 = vor.u32 %v387, %v390
        %v392 = vrot.slane %v391, 4
        %v394 = vshll.u32 %v247, 16
        %v396 = vrot.slane %v394, 5
        %v397 = vsel %vm263, %v392, %v396
        %v398 = vshrl.u32 %v247, 16
        %v400 = vrot.slane %v398, 4
        %v401 = vor.u32 %v400, %v396
        %v402 = vrot.slane %v401, 4
        %v404 = vshll.u32 %v258, 16
        %v406 = vrot.slane %v404, 5
        %v407 = vsel %vm263, %v402, %v406
        %v409 = vshrl.u32 %v248, 16
        %v411 = vrot.slane %v409, 4
        %v412 = vshll.u32 %v248, 16
        %v414 = vrot.slane %v412, 5
        %v415 = vor.u32 %v411, %v414
        %v416 = vrot.slane %v415, 4
        %v418 = vshll.u32 %v249, 16
        %v420 = vrot.slane %v418, 5
        %v421 = vsel %vm263, %v416, %v420
        %v422 = vshrl.u32 %v249, 16
        %v424 = vrot.slane %v422, 4
        %v425 = vor.u32 %v424, %v420
        %v426 = vrot.slane %v425, 4
        %v428 = vshll.u32 %v259, 16
        %v430 = vrot.slane %v428, 5
        %v431 = vsel %vm263, %v426, %v430
        %v433 = vshrl.u32 %v250, 16
        %v435 = vrot.slane %v433, 4
        %v436 = vshll.u32 %v250, 16
        %v438 = vrot.slane %v436, 5
        %v439 = vor.u32 %v435, %v438
        %v440 = vrot.slane %v439, 4
        %v442 = vshll.u32 %v251, 16
        %v444 = vrot.slane %v442, 5
        %v445 = vsel %vm263, %v440, %v444
        %v446 = vshrl.u32 %v251, 16
        %v448 = vrot.slane %v446, 4
        %v449 = vor.u32 %v448, %v444
        %v450 = vrot.slane %v449, 4
        %v452 = vshll.u32 %v260, 16
        %v454 = vrot.slane %v452, 5
        %v455 = vsel %vm263, %v450, %v454
        %s456 = scalar_lea.vmem [#allocation5], 2
        %v457 = vld [vmem:[%s456] sm:$0x3]
        %v458 = vunpack.c.l.b16 %v277
        %v459 = vunpack.c.l.b16 %v287
        %v460 = vunpack.c.l.b16 %v301
        %v461 = vunpack.c.l.b16 %v311
        %v462 = vunpack.c.l.b16 %v325
        %v463 = vunpack.c.l.b16 %v335
        %v464 = vunpack.c.l.b16 %v349
        %v465 = vunpack.c.l.b16 %v359
        %v466 = vunpack.c.l.b16 %v373
        %v467 = vunpack.c.l.b16 %v383
        %v468 = vunpack.c.l.b16 %v397
        %v469 = vunpack.c.l.b16 %v407
        %v470 = vunpack.c.l.b16 %v421
        %v471 = vunpack.c.l.b16 %v431
        %v472 = vunpack.c.l.b16 %v445
        %v473 = vunpack.c.l.b16 %v455
        %v474 = vpack.c.b16 %v459, %v458
        %v475 = vpack.c.b16 %v461, %v460
        %v476 = vpack.c.b16 %v463, %v462
        %v477 = vpack.c.b16 %v465, %v464
        %v478 = vpack.c.b16 %v467, %v466
        %v479 = vpack.c.b16 %v469, %v468
        %v480 = vpack.c.b16 %v471, %v470
        %v481 = vpack.c.b16 %v473, %v472
        %vm482 = vcmask 31744
        %v484 = vsel %vm482, %v474, 0
        %v487 = vsel %vm482, %v475, 0
        %v490 = vsel %vm482, %v476, 0
        %v493 = vsel %vm482, %v477, 0
        %v496 = vsel %vm482, %v478, 0
        %v499 = vsel %vm482, %v479, 0
        %v502 = vsel %vm482, %v480, 0
        %v505 = vsel %vm482, %v481, 0
        %vm507 = vcmask 1041408
        %v509 = vsel %vm507, %v457, 0
        %511 = vmatprep.subr.bf16.mxu0 0
        %512 = vmatpush1.bf16.msra.mxu0 %v509
        %513 = vmatprep.subr.bf16.mxu0 0
        %514 = vmatpush1.bf16.msra.mxu0 0
        %515 = vmatprep.subr.bf16.mxu0 0
        %516 = vmatpush1.bf16.msra.mxu0 0
        %517 = vmatprep.subr.bf16.mxu0 0
        %518 = vmatpush1.bf16.msra.mxu0 0
        %519 = vmatprep.subr.bf16.mxu0 0
        %520 = vmatpush1.bf16.msra.mxu0 0
        %521 = vmatprep.subr.bf16.mxu0 0
        %522 = vmatpush1.bf16.msra.mxu0 0
        %523 = vmatprep.subr.bf16.mxu0 0
        %524 = vmatpush1.bf16.msra.mxu0 0
        %525 = vmatprep.subr.bf16.mxu0 0
        %526 = vmatpush1.bf16.msra.mxu0 0
        %527 = vmatprep.subr.bf16.mxu0 0
        %528 = vmatpush1.bf16.msra.mxu0 0
        %529 = vmatprep.subr.bf16.mxu0 0
        %530 = vmatpush1.bf16.msra.mxu0 0
        %531 = vmatprep.subr.bf16.mxu0 0
        %532 = vmatpush1.bf16.msra.mxu0 0
        %533 = vmatprep.subr.bf16.mxu0 0
        %534 = vmatpush1.bf16.msra.mxu0 0
        %535 = vmatprep.subr.bf16.mxu0 0
        %536 = vmatpush1.bf16.msra.mxu0 0
        %537 = vmatprep.subr.bf16.mxu0 0
        %538 = vmatpush1.bf16.msra.mxu0 0
        %539 = vmatprep.subr.bf16.mxu0 0
        %540 = vmatpush1.bf16.msra.mxu0 0
        %541 = vmatprep.subr.bf16.mxu0 0
        %542 = vmatpush1.bf16.msra.mxu0 0
        %543 = vmatprep.mubr.bf16.mxu0 0
        %544 = vmatmul.mubr.bf16.gmra.mrb[0].mxu0 %v484
        %v545 = vpop.f32.mrb[0].mxu0
        %v546 = vadd.f32 0.0, %v545
        %v547 = vpop.f32.mrb[0].mxu0
        %v548 = vpop.f32.mrb[0].mxu0
        %v549 = vadd.f32 0.0, %v548
        %v550 = vpop.f32.mrb[0].mxu0
        %551 = vmatprep.mubr.bf16.mxu0 0
        %552 = vmatmul.mubr.bf16.gmra.mrb[0].mxu0 %v487
        %v553 = vpop.f32.mrb[0].mxu0
        %v554 = vadd.f32 0.0, %v553
        %v555 = vpop.f32.mrb[0].mxu0
        %v556 = vpop.f32.mrb[0].mxu0
        %v557 = vadd.f32 0.0, %v556
        %v558 = vpop.f32.mrb[0].mxu0
        %559 = vmatprep.mubr.bf16.mxu0 0
        %560 = vmatmul.mubr.bf16.gmra.mrb[0].mxu0 %v490
        %v561 = vpop.f32.mrb[0].mxu0
        %v562 = vadd.f32 0.0, %v561
        %v563 = vpop.f32.mrb[0].mxu0
        %v564 = vpop.f32.mrb[0].mxu0
        %v565 = vadd.f32 0.0, %v564
        %v566 = vpop.f32.mrb[0].mxu0
        %567 = vmatprep.mubr.bf16.mxu0 0
        %568 = vmatmul.mubr.bf16.gmra.mrb[0].mxu0 %v493
        %v569 = vpop.f32.mrb[0].mxu0
        %v570 = vadd.f32 0.0, %v569
        %v571 = vpop.f32.mrb[0].mxu0
        %v572 = vpop.f32.mrb[0].mxu0
        %v573 = vadd.f32 0.0, %v572
        %v574 = vpop.f32.mrb[0].mxu0
        %575 = vmatprep.mubr.bf16.mxu0 0
        %576 = vmatmul.mubr.bf16.gmra.mrb[0].mxu0 %v496
        %v577 = vpop.f32.mrb[0].mxu0
        %v578 = vadd.f32 0.0, %v577
        %v579 = vpop.f32.mrb[0].mxu0
        %v580 = vpop.f32.mrb[0].mxu0
        %v581 = vadd.f32 0.0, %v580
        %v582 = vpop.f32.mrb[0].mxu0
        %583 = vmatprep.mubr.bf16.mxu0 0
        %584 = vmatmul.mubr.bf16.gmra.mrb[0].mxu0 %v499
        %v585 = vpop.f32.mrb[0].mxu0
        %v586 = vadd.f32 0.0, %v585
        %v587 = vpop.f32.mrb[0].mxu0
        %v588 = vpop.f32.mrb[0].mxu0
        %v589 = vadd.f32 0.0, %v588
        %v590 = vpop.f32.mrb[0].mxu0
        %591 = vmatprep.mubr.bf16.mxu0 0
        %592 = vmatmul.mubr.bf16.gmra.mrb[0].mxu0 %v502
        %v593 = vpop.f32.mrb[0].mxu0
        %v594 = vadd.f32 0.0, %v593
        %v595 = vpop.f32.mrb[0].mxu0
        %v596 = vpop.f32.mrb[0].mxu0
        %v597 = vadd.f32 0.0, %v596
        %v598 = vpop.f32.mrb[0].mxu0
        %599 = vmatprep.mubr.bf16.mxu0 0
        %600 = vmatmul.mubr.bf16.gmra.mrb[0].mxu0 %v505
        %v601 = vpop.f32.mrb[0].mxu0
        %v602 = vadd.f32 0.0, %v601
        %v603 = vpop.f32.mrb[0].mxu0
        %v604 = vpop.f32.mrb[0].mxu0
        %v605 = vadd.f32 0.0, %v604
        %v606 = vpop.f32.mrb[0].mxu0
        %607 = vdwg.mxu0
        %v624 = vunpack.c.l.b16 %v236
        %v625 = vunpack.c.l.b16 %v237
        %v626 = vunpack.c.l.b16 %v238
        %v627 = vunpack.c.l.b16 %v239
        %v628 = vunpack.c.l.b16 %v240
        %v629 = vunpack.c.l.b16 %v241
        %v630 = vunpack.c.l.b16 %v242
        %v631 = vunpack.c.l.b16 %v243
        %v632 = vunpack.c.l.b16 %v244
        %v633 = vunpack.c.l.b16 %v245
        %v634 = vunpack.c.l.b16 %v246
        %v635 = vunpack.c.l.b16 %v247
        %v636 = vunpack.c.l.b16 %v248
        %v637 = vunpack.c.l.b16 %v249
        %v638 = vunpack.c.l.b16 %v250
        %v639 = vunpack.c.l.b16 %v251
        %v640 = vpack.c.b16 %v625, %v624
        %v641 = vpack.c.b16 %v627, %v626
        %v642 = vpack.c.b16 %v629, %v628
        %v643 = vpack.c.b16 %v631, %v630
        %v644 = vpack.c.b16 %v633, %v632
        %v645 = vpack.c.b16 %v635, %v634
        %v646 = vpack.c.b16 %v637, %v636
        %v647 = vpack.c.b16 %v639, %v638
        %v649 = vsel %vm482, %v640, 0
        %v652 = vsel %vm482, %v641, 0
        %v655 = vsel %vm482, %v642, 0
        %v658 = vsel %vm482, %v643, 0
        %v661 = vsel %vm482, %v644, 0
        %v664 = vsel %vm482, %v645, 0
        %v667 = vsel %vm482, %v646, 0
        %v670 = vsel %vm482, %v647, 0
        %v673 = vsel %vm507, %v252, 0
        %675 = vmatprep.subr.bf16.mxu0 0
        %676 = vmatpush1.bf16.msra.mxu0 %v673
        %677 = vmatprep.subr.bf16.mxu0 0
        %678 = vmatpush1.bf16.msra.mxu0 0
        %679 = vmatprep.subr.bf16.mxu0 0
        %680 = vmatpush1.bf16.msra.mxu0 0
        %681 = vmatprep.subr.bf16.mxu0 0
        %682 = vmatpush1.bf16.msra.mxu0 0
        %683 = vmatprep.subr.bf16.mxu0 0
        %684 = vmatpush1.bf16.msra.mxu0 0
        %685 = vmatprep.subr.bf16.mxu0 0
        %686 = vmatpush1.bf16.msra.mxu0 0
        %687 = vmatprep.subr.bf16.mxu0 0
        %688 = vmatpush1.bf16.msra.mxu0 0
        %689 = vmatprep.subr.bf16.mxu0 0
        %690 = vmatpush1.bf16.msra.mxu0 0
        %691 = vmatprep.subr.bf16.mxu0 0
        %692 = vmatpush1.bf16.msra.mxu0 0
        %693 = vmatprep.subr.bf16.mxu0 0
        %694 = vmatpush1.bf16.msra.mxu0 0
        %695 = vmatprep.subr.bf16.mxu0 0
        %696 = vmatpush1.bf16.msra.mxu0 0
        %697 = vmatprep.subr.bf16.mxu0 0
        %698 = vmatpush1.bf16.msra.mxu0 0
        %699 = vmatprep.subr.bf16.mxu0 0
        %700 = vmatpush1.bf16.msra.mxu0 0
        %701 = vmatprep.subr.bf16.mxu0 0
        %702 = vmatpush1.bf16.msra.mxu0 0
        %703 = vmatprep.subr.bf16.mxu0 0
        %704 = vmatpush1.bf16.msra.mxu0 0
        %705 = vmatprep.subr.bf16.mxu0 0
        %706 = vmatpush1.bf16.msra.mxu0 0
        %707 = vmatprep.mubr.bf16.mxu0 0
        %708 = vmatmul.mubr.bf16.gmra.mrb[0].mxu0 %v649
        %v709 = vpop.f32.mrb[0].mxu0
        %v710 = vadd.f32 %v546, %v709
        %v711 = vpop.f32.mrb[0].mxu0
        %v712 = vpop.f32.mrb[0].mxu0
        %v713 = vadd.f32 %v549, %v712
        %v714 = vpop.f32.mrb[0].mxu0
        %715 = vmatprep.mubr.bf16.mxu0 0
        %716 = vmatmul.mubr.bf16.gmra.mrb[0].mxu0 %v652
        %v717 = vpop.f32.mrb[0].mxu0
        %v718 = vadd.f32 %v554, %v717
        %v719 = vpop.f32.mrb[0].mxu0
        %v720 = vpop.f32.mrb[0].mxu0
        %v721 = vadd.f32 %v557, %v720
        %v722 = vpop.f32.mrb[0].mxu0
        %723 = vmatprep.mubr.bf16.mxu0 0
        %724 = vmatmul.mubr.bf16.gmra.mrb[0].mxu0 %v655
        %v725 = vpop.f32.mrb[0].mxu0
        %v726 = vadd.f32 %v562, %v725
        %v727 = vpop.f32.mrb[0].mxu0
        %v728 = vpop.f32.mrb[0].mxu0
        %v729 = vadd.f32 %v565, %v728
        %v730 = vpop.f32.mrb[0].mxu0
        %731 = vmatprep.mubr.bf16.mxu0 0
        %732 = vmatmul.mubr.bf16.gmra.mrb[0].mxu0 %v658
        %v733 = vpop.f32.mrb[0].mxu0
        %v734 = vadd.f32 %v570, %v733
        %v735 = vpop.f32.mrb[0].mxu0
        %v736 = vpop.f32.mrb[0].mxu0
        %v737 = vadd.f32 %v573, %v736
        %v738 = vpop.f32.mrb[0].mxu0
        %739 = vmatprep.mubr.bf16.mxu0 0
        %740 = vmatmul.mubr.bf16.gmra.mrb[0].mxu0 %v661
        %v741 = vpop.f32.mrb[0].mxu0
        %v742 = vadd.f32 %v578, %v741
        %v743 = vpop.f32.mrb[0].mxu0
        %v744 = vpop.f32.mrb[0].mxu0
        %v745 = vadd.f32 %v581, %v744
        %v746 = vpop.f32.mrb[0].mxu0
        %747 = vmatprep.mubr.bf16.mxu0 0
        %748 = vmatmul.mubr.bf16.gmra.mrb[0].mxu0 %v664
        %v749 = vpop.f32.mrb[0].mxu0
        %v750 = vadd.f32 %v586, %v749
        %v751 = vpop.f32.mrb[0].mxu0
        %v752 = vpop.f32.mrb[0].mxu0
        %v753 = vadd.f32 %v589, %v752
        %v754 = vpop.f32.mrb[0].mxu0
        %755 = vmatprep.mubr.bf16.mxu0 0
        %756 = vmatmul.mubr.bf16.gmra.mrb[0].mxu0 %v667
        %v757 = vpop.f32.mrb[0].mxu0
        %v758 = vadd.f32 %v594, %v757
        %v759 = vpop.f32.mrb[0].mxu0
        %v760 = vpop.f32.mrb[0].mxu0
        %v761 = vadd.f32 %v597, %v760
        %v762 = vpop.f32.mrb[0].mxu0
        %763 = vmatprep.mubr.bf16.mxu0 0
        %764 = vmatmul.mubr.bf16.gmra.mrb[0].mxu0 %v670
        %v765 = vpop.f32.mrb[0].mxu0
        %v766 = vadd.f32 %v602, %v765
        %v767 = vpop.f32.mrb[0].mxu0
        %v768 = vpop.f32.mrb[0].mxu0
        %v769 = vadd.f32 %v605, %v768
        %v770 = vpop.f32.mrb[0].mxu0
        %771 = vdwg.mxu0
        %v772 = vld [vmem:[%s235] sm:$0xe]
        %v773 = vld [vmem:[%s235 + $0xc] sm:$0xe]
        %v774 = vld [vmem:[%s235 + $0x18] sm:$0xe]
        %v775 = vld [vmem:[%s235 + $0x24] sm:$0xe]
        %v776 = vld [vmem:[%s235 + $0x30] sm:$0xe]
        %v777 = vld [vmem:[%s235 + $0x3c] sm:$0xe]
        %v778 = vld [vmem:[%s235 + $0x48] sm:$0xe]
        %v779 = vld [vmem:[%s235 + $0x54] sm:$0xe]
        %vm796 = vcmask 1042432
        %vm797 = vcmask 1046532
        %vm798 = vmor %vm796, %vm797
        %v799 = vrot.slane %v772, 5
        %v800 = vrot.slane %v799, 4
        %v801 = vrot.slane %v237, 5
        %v802 = vsel %vm798, %v800, %v801
        %v803 = vrot.slane %v801, 4
        %v804 = vrot.slane %v253, 5
        %v805 = vsel %vm798, %v803, %v804
        %v806 = vrot.slane %v773, 5
        %v807 = vrot.slane %v806, 4
        %v808 = vrot.slane %v239, 5
        %v809 = vsel %vm798, %v807, %v808
        %v810 = vrot.slane %v808, 4
        %v811 = vrot.slane %v254, 5
        %v812 = vsel %vm798, %v810, %v811
        %v813 = vrot.slane %v774, 5
        %v814 = vrot.slane %v813, 4
        %v815 = vrot.slane %v241, 5
        %v816 = vsel %vm798, %v814, %v815
        %v817 = vrot.slane %v815, 4
        %v818 = vrot.slane %v255, 5
        %v819 = vsel %vm798, %v817, %v818
        %v820 = vrot.slane %v775, 5
        %v821 = vrot.slane %v820, 4
        %v822 = vrot.slane %v243, 5
        %v823 = vsel %vm798, %v821, %v822
        %v824 = vrot.slane %v822, 4
        %v825 = vrot.slane %v256, 5
        %v826 = vsel %vm798, %v824, %v825
        %v827 = vrot.slane %v776, 5
        %v828 = vrot.slane %v827, 4
        %v829 = vrot.slane %v245, 5
        %v830 = vsel %vm798, %v828, %v829
        %v831 = vrot.slane %v829, 4
        %v832 = vrot.slane %v257, 5
        %v833 = vsel %vm798, %v831, %v832
        %v834 = vrot.slane %v777, 5
        %v835 = vrot.slane %v834, 4
        %v836 = vrot.slane %v247, 5
        %v837 = vsel %vm798, %v835, %v836
        %v838 = vrot.slane %v836, 4
        %v839 = vrot.slane %v258, 5
        %v840 = vsel %vm798, %v838, %v839
        %v841 = vrot.slane %v778, 5
        %v842 = vrot.slane %v841, 4
        %v843 = vrot.slane %v249, 5
        %v844 = vsel %vm798, %v842, %v843
        %v845 = vrot.slane %v843, 4
        %v846 = vrot.slane %v259, 5
        %v847 = vsel %vm798, %v845, %v846
        %v848 = vrot.slane %v779, 5
        %v849 = vrot.slane %v848, 4
        %v850 = vrot.slane %v251, 5
        %v851 = vsel %vm798, %v849, %v850
        %v852 = vrot.slane %v850, 4
        %v853 = vrot.slane %v260, 5
        %v854 = vsel %vm798, %v852, %v853
        %s855 = scalar_lea.vmem [#allocation5], 4
        %v856 = vld [vmem:[%s855] sm:$0x3]
        %v857 = vunpack.c.l.b16 %v802
        %v858 = vunpack.c.l.b16 %v805
        %v859 = vunpack.c.l.b16 %v809
        %v860 = vunpack.c.l.b16 %v812
        %v861 = vunpack.c.l.b16 %v816
        %v862 = vunpack.c.l.b16 %v819
        %v863 = vunpack.c.l.b16 %v823
        %v864 = vunpack.c.l.b16 %v826
        %v865 = vunpack.c.l.b16 %v830
        %v866 = vunpack.c.l.b16 %v833
        %v867 = vunpack.c.l.b16 %v837
        %v868 = vunpack.c.l.b16 %v840
        %v869 = vunpack.c.l.b16 %v844
        %v870 = vunpack.c.l.b16 %v847
        %v871 = vunpack.c.l.b16 %v851
        %v872 = vunpack.c.l.b16 %v854
        %v873 = vpack.c.b16 %v858, %v857
        %v874 = vpack.c.b16 %v860, %v859
        %v875 = vpack.c.b16 %v862, %v861
        %v876 = vpack.c.b16 %v864, %v863
        %v877 = vpack.c.b16 %v866, %v865
        %v878 = vpack.c.b16 %v868, %v867
        %v879 = vpack.c.b16 %v870, %v869
        %v880 = vpack.c.b16 %v872, %v871
        %v882 = vsel %vm482, %v873, 0
        %v885 = vsel %vm482, %v874, 0
        %v888 = vsel %vm482, %v875, 0
        %v891 = vsel %vm482, %v876, 0
        %v894 = vsel %vm482, %v877, 0
        %v897 = vsel %vm482, %v878, 0
        %v900 = vsel %vm482, %v879, 0
        %v903 = vsel %vm482, %v880, 0
        %v906 = vsel %vm507, %v856, 0
        %908 = vmatprep.subr.bf16.mxu0 0
        %909 = vmatpush1.bf16.msra.mxu0 %v906
        %910 = vmatprep.subr.bf16.mxu0 0
        %911 = vmatpush1.bf16.msra.mxu0 0
        %912 = vmatprep.subr.bf16.mxu0 0
        %913 = vmatpush1.bf16.msra.mxu0 0
        %914 = vmatprep.subr.bf16.mxu0 0
        %915 = vmatpush1.bf16.msra.mxu0 0
        %916 = vmatprep.subr.bf16.mxu0 0
        %917 = vmatpush1.bf16.msra.mxu0 0
        %918 = vmatprep.subr.bf16.mxu0 0
        %919 = vmatpush1.bf16.msra.mxu0 0
        %920 = vmatprep.subr.bf16.mxu0 0
        %921 = vmatpush1.bf16.msra.mxu0 0
        %922 = vmatprep.subr.bf16.mxu0 0
        %923 = vmatpush1.bf16.msra.mxu0 0
        %924 = vmatprep.subr.bf16.mxu0 0
        %925 = vmatpush1.bf16.msra.mxu0 0
        %926 = vmatprep.subr.bf16.mxu0 0
        %927 = vmatpush1.bf16.msra.mxu0 0
        %928 = vmatprep.subr.bf16.mxu0 0
        %929 = vmatpush1.bf16.msra.mxu0 0
        %930 = vmatprep.subr.bf16.mxu0 0
        %931 = vmatpush1.bf16.msra.mxu0 0
        %932 = vmatprep.subr.bf16.mxu0 0
        %933 = vmatpush1.bf16.msra.mxu0 0
        %934 = vmatprep.subr.bf16.mxu0 0
        %935 = vmatpush1.bf16.msra.mxu0 0
        %936 = vmatprep.subr.bf16.mxu0 0
        %937 = vmatpush1.bf16.msra.mxu0 0
        %938 = vmatprep.subr.bf16.mxu0 0
        %939 = vmatpush1.bf16.msra.mxu0 0
        %940 = vmatprep.mubr.bf16.mxu0 0
        %941 = vmatmul.mubr.bf16.gmra.mrb[0].mxu0 %v882
        %v942 = vpop.f32.mrb[0].mxu0
        %v943 = vadd.f32 0.0, %v942
        %v944 = vpop.f32.mrb[0].mxu0
        %v945 = vpop.f32.mrb[0].mxu0
        %v946 = vadd.f32 0.0, %v945
        %v947 = vpop.f32.mrb[0].mxu0
        %948 = vmatprep.mubr.bf16.mxu0 0
        %949 = vmatmul.mubr.bf16.gmra.mrb[0].mxu0 %v885
        %v950 = vpop.f32.mrb[0].mxu0
        %v951 = vadd.f32 0.0, %v950
        %v952 = vpop.f32.mrb[0].mxu0
        %v953 = vpop.f32.mrb[0].mxu0
        %v954 = vadd.f32 0.0, %v953
        %v955 = vpop.f32.mrb[0].mxu0
        %956 = vmatprep.mubr.bf16.mxu0 0
        %957 = vmatmul.mubr.bf16.gmra.mrb[0].mxu0 %v888
        %v958 = vpop.f32.mrb[0].mxu0
        %v959 = vadd.f32 0.0, %v958
        %v960 = vpop.f32.mrb[0].mxu0
        %v961 = vpop.f32.mrb[0].mxu0
        %v962 = vadd.f32 0.0, %v961
        %v963 = vpop.f32.mrb[0].mxu0
        %964 = vmatprep.mubr.bf16.mxu0 0
        %965 = vmatmul.mubr.bf16.gmra.mrb[0].mxu0 %v891
        %v966 = vpop.f32.mrb[0].mxu0
        %v967 = vadd.f32 0.0, %v966
        %v968 = vpop.f32.mrb[0].mxu0
        %v969 = vpop.f32.mrb[0].mxu0
        %v970 = vadd.f32 0.0, %v969
        %v971 = vpop.f32.mrb[0].mxu0
        %972 = vmatprep.mubr.bf16.mxu0 0
        %973 = vmatmul.mubr.bf16.gmra.mrb[0].mxu0 %v894
        %v974 = vpop.f32.mrb[0].mxu0
        %v975 = vadd.f32 0.0, %v974
        %v976 = vpop.f32.mrb[0].mxu0
        %v977 = vpop.f32.mrb[0].mxu0
        %v978 = vadd.f32 0.0, %v977
        %v979 = vpop.f32.mrb[0].mxu0
        %980 = vmatprep.mubr.bf16.mxu0 0
        %981 = vmatmul.mubr.bf16.gmra.mrb[0].mxu0 %v897
        %v982 = vpop.f32.mrb[0].mxu0
        %v983 = vadd.f32 0.0, %v982
        %v984 = vpop.f32.mrb[0].mxu0
        %v985 = vpop.f32.mrb[0].mxu0
        %v986 = vadd.f32 0.0, %v985
        %v987 = vpop.f32.mrb[0].mxu0
        %988 = vmatprep.mubr.bf16.mxu0 0
        %989 = vmatmul.mubr.bf16.gmra.mrb[0].mxu0 %v900
        %v990 = vpop.f32.mrb[0].mxu0
        %v991 = vadd.f32 0.0, %v990
        %v992 = vpop.f32.mrb[0].mxu0
        %v993 = vpop.f32.mrb[0].mxu0
        %v994 = vadd.f32 0.0, %v993
        %v995 = vpop.f32.mrb[0].mxu0
        %996 = vmatprep.mubr.bf16.mxu0 0
        %997 = vmatmul.mubr.bf16.gmra.mrb[0].mxu0 %v903
        %v998 = vpop.f32.mrb[0].mxu0
        %v999 = vadd.f32 0.0, %v998
        %v1000 = vpop.f32.mrb[0].mxu0
        %v1001 = vpop.f32.mrb[0].mxu0
        %v1002 = vadd.f32 0.0, %v1001
        %v1003 = vpop.f32.mrb[0].mxu0
        %1004 = vdwg.mxu0
        %v1005 = vadd.f32 %v710, %v943
        %v1006 = vadd.f32 %v713, %v946
        %v1007 = vadd.f32 %v718, %v951
        %v1008 = vadd.f32 %v721, %v954
        %v1009 = vadd.f32 %v726, %v959
        %v1010 = vadd.f32 %v729, %v962
        %v1011 = vadd.f32 %v734, %v967
        %v1012 = vadd.f32 %v737, %v970
        %v1013 = vadd.f32 %v742, %v975
        %v1014 = vadd.f32 %v745, %v978
        %v1015 = vadd.f32 %v750, %v983
        %v1016 = vadd.f32 %v753, %v986
        %v1017 = vadd.f32 %v758, %v991
        %v1018 = vadd.f32 %v761, %v994
        %v1019 = vadd.f32 %v766, %v999
        %v1020 = vadd.f32 %v769, %v1002
        %s1021 = sadd.s32 %s232, 1
        %s1022 = smul.u32 %s1021, 3
        %s1023 = smul.addr %s1022, 4
        %s1024 = scalar_lea.vmem %s199, %s1023 [#allocation2]
        %v1025 = vld [vmem:[%s1024] sm:$0xf]
        %v1026 = vld [vmem:[%s1024 + $0x4] sm:$0xf]
        %v1027 = vld [vmem:[%s1024 + $0xc] sm:$0xf]
        %v1028 = vld [vmem:[%s1024 + $0x10] sm:$0xf]
        %v1029 = vld [vmem:[%s1024 + $0x18] sm:$0xf]
        %v1030 = vld [vmem:[%s1024 + $0x1c] sm:$0xf]
        %v1031 = vld [vmem:[%s1024 + $0x24] sm:$0xf]
        %v1032 = vld [vmem:[%s1024 + $0x28] sm:$0xf]
        %v1033 = vld [vmem:[%s1024 + $0x30] sm:$0xf]
        %v1034 = vld [vmem:[%s1024 + $0x34] sm:$0xf]
        %v1035 = vld [vmem:[%s1024 + $0x3c] sm:$0xf]
        %v1036 = vld [vmem:[%s1024 + $0x40] sm:$0xf]
        %v1037 = vld [vmem:[%s1024 + $0x48] sm:$0xf]
        %v1038 = vld [vmem:[%s1024 + $0x4c] sm:$0xf]
        %v1039 = vld [vmem:[%s1024 + $0x54] sm:$0xf]
        %v1040 = vld [vmem:[%s1024 + $0x58] sm:$0xf]
        %s1041 = scalar_lea.vmem [#allocation5], 6
        %v1042 = vld [vmem:[%s1041] sm:$0x3]
        %v1059 = vunpack.c.l.b16 %v1025
        %v1060 = vunpack.c.l.b16 %v1026
        %v1061 = vunpack.c.l.b16 %v1027
        %v1062 = vunpack.c.l.b16 %v1028
        %v1063 = vunpack.c.l.b16 %v1029
        %v1064 = vunpack.c.l.b16 %v1030
        %v1065 = vunpack.c.l.b16 %v1031
        %v1066 = vunpack.c.l.b16 %v1032
        %v1067 = vunpack.c.l.b16 %v1033
        %v1068 = vunpack.c.l.b16 %v1034
        %v1069 = vunpack.c.l.b16 %v1035
        %v1070 = vunpack.c.l.b16 %v1036
        %v1071 = vunpack.c.l.b16 %v1037
        %v1072 = vunpack.c.l.b16 %v1038
        %v1073 = vunpack.c.l.b16 %v1039
        %v1074 = vunpack.c.l.b16 %v1040
        %v1075 = vpack.c.b16 %v1060, %v1059
        %v1076 = vpack.c.b16 %v1062, %v1061
        %v1077 = vpack.c.b16 %v1064, %v1063
        %v1078 = vpack.c.b16 %v1066, %v1065
        %v1079 = vpack.c.b16 %v1068, %v1067
        %v1080 = vpack.c.b16 %v1070, %v1069
        %v1081 = vpack.c.b16 %v1072, %v1071
        %v1082 = vpack.c.b16 %v1074, %v1073
        %v1084 = vsel %vm482, %v1075, 0
        %v1087 = vsel %vm482, %v1076, 0
        %v1090 = vsel %vm482, %v1077, 0
        %v1093 = vsel %vm482, %v1078, 0
        %v1096 = vsel %vm482, %v1079, 0
        %v1099 = vsel %vm482, %v1080, 0
        %v1102 = vsel %vm482, %v1081, 0
        %v1105 = vsel %vm482, %v1082, 0
        %v1108 = vsel %vm507, %v1042, 0
        %1110 = vmatprep.subr.bf16.mxu0 0
        %1111 = vmatpush1.bf16.msra.mxu0 %v1108
        %1112 = vmatprep.subr.bf16.mxu0 0
        %1113 = vmatpush1.bf16.msra.mxu0 0
        %1114 = vmatprep.subr.bf16.mxu0 0
        %1115 = vmatpush1.bf16.msra.mxu0 0
        %1116 = vmatprep.subr.bf16.mxu0 0
        %1117 = vmatpush1.bf16.msra.mxu0 0
        %1118 = vmatprep.subr.bf16.mxu0 0
        %1119 = vmatpush1.bf16.msra.mxu0 0
        %1120 = vmatprep.subr.bf16.mxu0 0
        %1121 = vmatpush1.bf16.msra.mxu0 0
        %1122 = vmatprep.subr.bf16.mxu0 0
        %1123 = vmatpush1.bf16.msra.mxu0 0
        %1124 = vmatprep.subr.bf16.mxu0 0
        %1125 = vmatpush1.bf16.msra.mxu0 0
        %1126 = vmatprep.subr.bf16.mxu0 0
        %1127 = vmatpush1.bf16.msra.mxu0 0
        %1128 = vmatprep.subr.bf16.mxu0 0
        %1129 = vmatpush1.bf16.msra.mxu0 0
        %1130 = vmatprep.subr.bf16.mxu0 0
        %1131 = vmatpush1.bf16.msra.mxu0 0
        %1132 = vmatprep.subr.bf16.mxu0 0
        %1133 = vmatpush1.bf16.msra.mxu0 0
        %1134 = vmatprep.subr.bf16.mxu0 0
        %1135 = vmatpush1.bf16.msra.mxu0 0
        %1136 = vmatprep.subr.bf16.mxu0 0
        %1137 = vmatpush1.bf16.msra.mxu0 0
        %1138 = vmatprep.subr.bf16.mxu0 0
        %1139 = vmatpush1.bf16.msra.mxu0 0
        %1140 = vmatprep.subr.bf16.mxu0 0
        %1141 = vmatpush1.bf16.msra.mxu0 0
        %1142 = vmatprep.mubr.bf16.mxu0 0
        %1143 = vmatmul.mubr.bf16.gmra.mrb[0].mxu0 %v1084
        %v1144 = vpop.f32.mrb[0].mxu0
        %v1145 = vadd.f32 0.0, %v1144
        %v1146 = vpop.f32.mrb[0].mxu0
        %v1147 = vpop.f32.mrb[0].mxu0
        %v1148 = vadd.f32 0.0, %v1147
        %v1149 = vpop.f32.mrb[0].mxu0
        %1150 = vmatprep.mubr.bf16.mxu0 0
        %1151 = vmatmul.mubr.bf16.gmra.mrb[0].mxu0 %v1087
        %v1152 = vpop.f32.mrb[0].mxu0
        %v1153 = vadd.f32 0.0, %v1152
        %v1154 = vpop.f32.mrb[0].mxu0
        %v1155 = vpop.f32.mrb[0].mxu0
        %v1156 = vadd.f32 0.0, %v1155
        %v1157 = vpop.f32.mrb[0].mxu0
        %1158 = vmatprep.mubr.bf16.mxu0 0
        %1159 = vmatmul.mubr.bf16.gmra.mrb[0].mxu0 %v1090
        %v1160 = vpop.f32.mrb[0].mxu0
        %v1161 = vadd.f32 0.0, %v1160
        %v1162 = vpop.f32.mrb[0].mxu0
        %v1163 = vpop.f32.mrb[0].mxu0
        %v1164 = vadd.f32 0.0, %v1163
        %v1165 = vpop.f32.mrb[0].mxu0
        %1166 = vmatprep.mubr.bf16.mxu0 0
        %1167 = vmatmul.mubr.bf16.gmra.mrb[0].mxu0 %v1093
        %v1168 = vpop.f32.mrb[0].mxu0
        %v1169 = vadd.f32 0.0, %v1168
        %v1170 = vpop.f32.mrb[0].mxu0
        %v1171 = vpop.f32.mrb[0].mxu0
        %v1172 = vadd.f32 0.0, %v1171
        %v1173 = vpop.f32.mrb[0].mxu0
        %1174 = vmatprep.mubr.bf16.mxu0 0
        %1175 = vmatmul.mubr.bf16.gmra.mrb[0].mxu0 %v1096
        %v1176 = vpop.f32.mrb[0].mxu0
        %v1177 = vadd.f32 0.0, %v1176
        %v1178 = vpop.f32.mrb[0].mxu0
        %v1179 = vpop.f32.mrb[0].mxu0
        %v1180 = vadd.f32 0.0, %v1179
        %v1181 = vpop.f32.mrb[0].mxu0
        %1182 = vmatprep.mubr.bf16.mxu0 0
        %1183 = vmatmul.mubr.bf16.gmra.mrb[0].mxu0 %v1099
        %v1184 = vpop.f32.mrb[0].mxu0
        %v1185 = vadd.f32 0.0, %v1184
        %v1186 = vpop.f32.mrb[0].mxu0
        %v1187 = vpop.f32.mrb[0].mxu0
        %v1188 = vadd.f32 0.0, %v1187
        %v1189 = vpop.f32.mrb[0].mxu0
        %1190 = vmatprep.mubr.bf16.mxu0 0
        %1191 = vmatmul.mubr.bf16.gmra.mrb[0].mxu0 %v1102
        %v1192 = vpop.f32.mrb[0].mxu0
        %v1193 = vadd.f32 0.0, %v1192
        %v1194 = vpop.f32.mrb[0].mxu0
        %v1195 = vpop.f32.mrb[0].mxu0
        %v1196 = vadd.f32 0.0, %v1195
        %v1197 = vpop.f32.mrb[0].mxu0
        %1198 = vmatprep.mubr.bf16.mxu0 0
        %1199 = vmatmul.mubr.bf16.gmra.mrb[0].mxu0 %v1105
        %v1200 = vpop.f32.mrb[0].mxu0
        %v1201 = vadd.f32 0.0, %v1200
        %v1202 = vpop.f32.mrb[0].mxu0
        %v1203 = vpop.f32.mrb[0].mxu0
        %v1204 = vadd.f32 0.0, %v1203
        %v1205 = vpop.f32.mrb[0].mxu0
        %1206 = vdwg.mxu0
        %v1207 = vadd.f32 %v1005, %v1145
        %v1208 = vadd.f32 %v1006, %v1148
        %v1209 = vadd.f32 %v1007, %v1153
        %v1210 = vadd.f32 %v1008, %v1156
        %v1211 = vadd.f32 %v1009, %v1161
        %v1212 = vadd.f32 %v1010, %v1164
        %v1213 = vadd.f32 %v1011, %v1169
        %v1214 = vadd.f32 %v1012, %v1172
        %v1215 = vadd.f32 %v1013, %v1177
        %v1216 = vadd.f32 %v1014, %v1180
        %v1217 = vadd.f32 %v1015, %v1185
        %v1218 = vadd.f32 %v1016, %v1188
        %v1219 = vadd.f32 %v1017, %v1193
        %v1220 = vadd.f32 %v1018, %v1196
        %v1221 = vadd.f32 %v1019, %v1201
        %v1222 = vadd.f32 %v1020, %v1204
        %v1223 = vld [vmem:[%s1024] sm:$0xf]
        %v1224 = vld [vmem:[%s1024 + $0x4] sm:$0xf]
        %v1225 = vld [vmem:[%s1024 + $0x8] sm:$0x1]
        %v1226 = vld [vmem:[%s1024 + $0xc] sm:$0xf]
        %v1227 = vld [vmem:[%s1024 + $0x10] sm:$0xf]
        %v1228 = vld [vmem:[%s1024 + $0x14] sm:$0x1]
        %v1229 = vld [vmem:[%s1024 + $0x18] sm:$0xf]
        %v1230 = vld [vmem:[%s1024 + $0x1c] sm:$0xf]
        %v1231 = vld [vmem:[%s1024 + $0x20] sm:$0x1]
        %v1232 = vld [vmem:[%s1024 + $0x24] sm:$0xf]
        %v1233 = vld [vmem:[%s1024 + $0x28] sm:$0xf]
        %v1234 = vld [vmem:[%s1024 + $0x2c] sm:$0x1]
        %v1235 = vld [vmem:[%s1024 + $0x30] sm:$0xf]
        %v1236 = vld [vmem:[%s1024 + $0x34] sm:$0xf]
        %v1237 = vld [vmem:[%s1024 + $0x38] sm:$0x1]
        %v1238 = vld [vmem:[%s1024 + $0x3c] sm:$0xf]
        %v1239 = vld [vmem:[%s1024 + $0x40] sm:$0xf]
        %v1240 = vld [vmem:[%s1024 + $0x44] sm:$0x1]
        %v1241 = vld [vmem:[%s1024 + $0x48] sm:$0xf]
        %v1242 = vld [vmem:[%s1024 + $0x4c] sm:$0xf]
        %v1243 = vld [vmem:[%s1024 + $0x50] sm:$0x1]
        %v1244 = vld [vmem:[%s1024 + $0x54] sm:$0xf]
        %v1245 = vld [vmem:[%s1024 + $0x58] sm:$0xf]
        %v1246 = vld [vmem:[%s1024 + $0x5c] sm:$0x1]
        %v1248 = vshrl.u32 %v1223, 16
        %v1250 = vrot.slane %v1248, 4
        %v1251 = vshll.u32 %v1223, 16
        %v1253 = vrot.slane %v1251, 5
        %v1254 = vor.u32 %v1250, %v1253
        %v1255 = vrot.slane %v1254, 4
        %v1257 = vshll.u32 %v1224, 16
        %v1259 = vrot.slane %v1257, 5
        %v1260 = vsel %vm263, %v1255, %v1259
        %v1261 = vshrl.u32 %v1224, 16
        %v1263 = vrot.slane %v1261, 4
        %v1264 = vor.u32 %v1263, %v1259
        %v1265 = vrot.slane %v1264, 4
        %v1267 = vshll.u32 %v1225, 16
        %v1269 = vrot.slane %v1267, 5
        %v1270 = vsel %vm263, %v1265, %v1269
        %v1272 = vshrl.u32 %v1226, 16
        %v1274 = vrot.slane %v1272, 4
        %v1275 = vshll.u32 %v1226, 16
        %v1277 = vrot.slane %v1275, 5
        %v1278 = vor.u32 %v1274, %v1277
        %v1279 = vrot.slane %v1278, 4
        %v1281 = vshll.u32 %v1227, 16
        %v1283 = vrot.slane %v1281, 5
        %v1284 = vsel %vm263, %v1279, %v1283
        %v1285 = vshrl.u32 %v1227, 16
        %v1287 = vrot.slane %v1285, 4
        %v1288 = vor.u32 %v1287, %v1283
        %v1289 = vrot.slane %v1288, 4
        %v1291 = vshll.u32 %v1228, 16
        %v1293 = vrot.slane %v1291, 5
        %v1294 = vsel %vm263, %v1289, %v1293
        %v1296 = vshrl.u32 %v1229, 16
        %v1298 = vrot.slane %v1296, 4
        %v1299 = vshll.u32 %v1229, 16
        %v1301 = vrot.slane %v1299, 5
        %v1302 = vor.u32 %v1298, %v1301
        %v1303 = vrot.slane %v1302, 4
        %v1305 = vshll.u32 %v1230, 16
        %v1307 = vrot.slane %v1305, 5
        %v1308 = vsel %vm263, %v1303, %v1307
        %v1309 = vshrl.u32 %v1230, 16
        %v1311 = vrot.slane %v1309, 4
        %v1312 = vor.u32 %v1311, %v1307
        %v1313 = vrot.slane %v1312, 4
        %v1315 = vshll.u32 %v1231, 16
        %v1317 = vrot.slane %v1315, 5
        %v1318 = vsel %vm263, %v1313, %v1317
        %v1320 = vshrl.u32 %v1232, 16
        %v1322 = vrot.slane %v1320, 4
        %v1323 = vshll.u32 %v1232, 16
        %v1325 = vrot.slane %v1323, 5
        %v1326 = vor.u32 %v1322, %v1325
        %v1327 = vrot.slane %v1326, 4
        %v1329 = vshll.u32 %v1233, 16
        %v1331 = vrot.slane %v1329, 5
        %v1332 = vsel %vm263, %v1327, %v1331
        %v1333 = vshrl.u32 %v1233, 16
        %v1335 = vrot.slane %v1333, 4
        %v1336 = vor.u32 %v1335, %v1331
        %v1337 = vrot.slane %v1336, 4
        %v1339 = vshll.u32 %v1234, 16
        %v1341 = vrot.slane %v1339, 5
        %v1342 = vsel %vm263, %v1337, %v1341
        %v1344 = vshrl.u32 %v1235, 16
        %v1346 = vrot.slane %v1344, 4
        %v1347 = vshll.u32 %v1235, 16
        %v1349 = vrot.slane %v1347, 5
        %v1350 = vor.u32 %v1346, %v1349
        %v1351 = vrot.slane %v1350, 4
        %v1353 = vshll.u32 %v1236, 16
        %v1355 = vrot.slane %v1353, 5
        %v1356 = vsel %vm263, %v1351, %v1355
        %v1357 = vshrl.u32 %v1236, 16
        %v1359 = vrot.slane %v1357, 4
        %v1360 = vor.u32 %v1359, %v1355
        %v1361 = vrot.slane %v1360, 4
        %v1363 = vshll.u32 %v1237, 16
        %v1365 = vrot.slane %v1363, 5
        %v1366 = vsel %vm263, %v1361, %v1365
        %v1368 = vshrl.u32 %v1238, 16
        %v1370 = vrot.slane %v1368, 4
        %v1371 = vshll.u32 %v1238, 16
        %v1373 = vrot.slane %v1371, 5
        %v1374 = vor.u32 %v1370, %v1373
        %v1375 = vrot.slane %v1374, 4
        %v1377 = vshll.u32 %v1239, 16
        %v1379 = vrot.slane %v1377, 5
        %v1380 = vsel %vm263, %v1375, %v1379
        %v1381 = vshrl.u32 %v1239, 16
        %v1383 = vrot.slane %v1381, 4
        %v1384 = vor.u32 %v1383, %v1379
        %v1385 = vrot.slane %v1384, 4
        %v1387 = vshll.u32 %v1240, 16
        %v1389 = vrot.slane %v1387, 5
        %v1390 = vsel %vm263, %v1385, %v1389
        %v1392 = vshrl.u32 %v1241, 16
        %v1394 = vrot.slane %v1392, 4
        %v1395 = vshll.u32 %v1241, 16
        %v1397 = vrot.slane %v1395, 5
        %v1398 = vor.u32 %v1394, %v1397
        %v1399 = vrot.slane %v1398, 4
        %v1401 = vshll.u32 %v1242, 16
        %v1403 = vrot.slane %v1401, 5
        %v1404 = vsel %vm263, %v1399, %v1403
        %v1405 = vshrl.u32 %v1242, 16
        %v1407 = vrot.slane %v1405, 4
        %v1408 = vor.u32 %v1407, %v1403
        %v1409 = vrot.slane %v1408, 4
        %v1411 = vshll.u32 %v1243, 16
        %v1413 = vrot.slane %v1411, 5
        %v1414 = vsel %vm263, %v1409, %v1413
        %v1416 = vshrl.u32 %v1244, 16
        %v1418 = vrot.slane %v1416, 4
        %v1419 = vshll.u32 %v1244, 16
        %v1421 = vrot.slane %v1419, 5
        %v1422 = vor.u32 %v1418, %v1421
        %v1423 = vrot.slane %v1422, 4
        %v1425 = vshll.u32 %v1245, 16
        %v1427 = vrot.slane %v1425, 5
        %v1428 = vsel %vm263, %v1423, %v1427
        %v1429 = vshrl.u32 %v1245, 16
        %v1431 = vrot.slane %v1429, 4
        %v1432 = vor.u32 %v1431, %v1427
        %v1433 = vrot.slane %v1432, 4
        %v1435 = vshll.u32 %v1246, 16
        %v1437 = vrot.slane %v1435, 5
        %v1438 = vsel %vm263, %v1433, %v1437
        %s1439 = scalar_lea.vmem [#allocation5], 8
        %v1440 = vld [vmem:[%s1439] sm:$0x3]
        %v1441 = vunpack.c.l.b16 %v1260
        %v1442 = vunpack.c.l.b16 %v1270
        %v1443 = vunpack.c.l.b16 %v1284
        %v1444 = vunpack.c.l.b16 %v1294
        %v1445 = vunpack.c.l.b16 %v1308
        %v1446 = vunpack.c.l.b16 %v1318
        %v1447 = vunpack.c.l.b16 %v1332
        %v1448 = vunpack.c.l.b16 %v1342
        %v1449 = vunpack.c.l.b16 %v1356
        %v1450 = vunpack.c.l.b16 %v1366
        %v1451 = vunpack.c.l.b16 %v1380
        %v1452 = vunpack.c.l.b16 %v1390
        %v1453 = vunpack.c.l.b16 %v1404
        %v1454 = vunpack.c.l.b16 %v1414
        %v1455 = vunpack.c.l.b16 %v1428
        %v1456 = vunpack.c.l.b16 %v1438
        %v1457 = vpack.c.b16 %v1442, %v1441
        %v1458 = vpack.c.b16 %v1444, %v1443
        %v1459 = vpack.c.b16 %v1446, %v1445
        %v1460 = vpack.c.b16 %v1448, %v1447
        %v1461 = vpack.c.b16 %v1450, %v1449
        %v1462 = vpack.c.b16 %v1452, %v1451
        %v1463 = vpack.c.b16 %v1454, %v1453
        %v1464 = vpack.c.b16 %v1456, %v1455
        %v1466 = vsel %vm482, %v1457, 0
        %v1469 = vsel %vm482, %v1458, 0
        %v1472 = vsel %vm482, %v1459, 0
        %v1475 = vsel %vm482, %v1460, 0
        %v1478 = vsel %vm482, %v1461, 0
        %v1481 = vsel %vm482, %v1462, 0
        %v1484 = vsel %vm482, %v1463, 0
        %v1487 = vsel %vm482, %v1464, 0
        %v1490 = vsel %vm507, %v1440, 0
        %1492 = vmatprep.subr.bf16.mxu0 0
        %1493 = vmatpush1.bf16.msra.mxu0 %v1490
        %1494 = vmatprep.subr.bf16.mxu0 0
        %1495 = vmatpush1.bf16.msra.mxu0 0
        %1496 = vmatprep.subr.bf16.mxu0 0
        %1497 = vmatpush1.bf16.msra.mxu0 0
        %1498 = vmatprep.subr.bf16.mxu0 0
        %1499 = vmatpush1.bf16.msra.mxu0 0
        %1500 = vmatprep.subr.bf16.mxu0 0
        %1501 = vmatpush1.bf16.msra.mxu0 0
        %1502 = vmatprep.subr.bf16.mxu0 0
        %1503 = vmatpush1.bf16.msra.mxu0 0
        %1504 = vmatprep.subr.bf16.mxu0 0
        %1505 = vmatpush1.bf16.msra.mxu0 0
        %1506 = vmatprep.subr.bf16.mxu0 0
        %1507 = vmatpush1.bf16.msra.mxu0 0
        %1508 = vmatprep.subr.bf16.mxu0 0
        %1509 = vmatpush1.bf16.msra.mxu0 0
        %1510 = vmatprep.subr.bf16.mxu0 0
        %1511 = vmatpush1.bf16.msra.mxu0 0
        %1512 = vmatprep.subr.bf16.mxu0 0
        %1513 = vmatpush1.bf16.msra.mxu0 0
        %1514 = vmatprep.subr.bf16.mxu0 0
        %1515 = vmatpush1.bf16.msra.mxu0 0
        %1516 = vmatprep.subr.bf16.mxu0 0
        %1517 = vmatpush1.bf16.msra.mxu0 0
        %1518 = vmatprep.subr.bf16.mxu0 0
        %1519 = vmatpush1.bf16.msra.mxu0 0
        %1520 = vmatprep.subr.bf16.mxu0 0
        %1521 = vmatpush1.bf16.msra.mxu0 0
        %1522 = vmatprep.subr.bf16.mxu0 0
        %1523 = vmatpush1.bf16.msra.mxu0 0
        %1524 = vmatprep.mubr.bf16.mxu0 0
        %1525 = vmatmul.mubr.bf16.gmra.mrb[0].mxu0 %v1466
        %v1526 = vpop.f32.mrb[0].mxu0
        %v1527 = vadd.f32 0.0, %v1526
        %v1528 = vpop.f32.mrb[0].mxu0
        %v1529 = vpop.f32.mrb[0].mxu0
        %v1530 = vadd.f32 0.0, %v1529
        %v1531 = vpop.f32.mrb[0].mxu0
        %1532 = vmatprep.mubr.bf16.mxu0 0
        %1533 = vmatmul.mubr.bf16.gmra.mrb[0].mxu0 %v1469
        %v1534 = vpop.f32.mrb[0].mxu0
        %v1535 = vadd.f32 0.0, %v1534
        %v1536 = vpop.f32.mrb[0].mxu0
        %v1537 = vpop.f32.mrb[0].mxu0
        %v1538 = vadd.f32 0.0, %v1537
        %v1539 = vpop.f32.mrb[0].mxu0
        %1540 = vmatprep.mubr.bf16.mxu0 0
        %1541 = vmatmul.mubr.bf16.gmra.mrb[0].mxu0 %v1472
        %v1542 = vpop.f32.mrb[0].mxu0
        %v1543 = vadd.f32 0.0, %v1542
        %v1544 = vpop.f32.mrb[0].mxu0
        %v1545 = vpop.f32.mrb[0].mxu0
        %v1546 = vadd.f32 0.0, %v1545
        %v1547 = vpop.f32.mrb[0].mxu0
        %1548 = vmatprep.mubr.bf16.mxu0 0
        %1549 = vmatmul.mubr.bf16.gmra.mrb[0].mxu0 %v1475
        %v1550 = vpop.f32.mrb[0].mxu0
        %v1551 = vadd.f32 0.0, %v1550
        %v1552 = vpop.f32.mrb[0].mxu0
        %v1553 = vpop.f32.mrb[0].mxu0
        %v1554 = vadd.f32 0.0, %v1553
        %v1555 = vpop.f32.mrb[0].mxu0
        %1556 = vmatprep.mubr.bf16.mxu0 0
        %1557 = vmatmul.mubr.bf16.gmra.mrb[0].mxu0 %v1478
        %v1558 = vpop.f32.mrb[0].mxu0
        %v1559 = vadd.f32 0.0, %v1558
        %v1560 = vpop.f32.mrb[0].mxu0
        %v1561 = vpop.f32.mrb[0].mxu0
        %v1562 = vadd.f32 0.0, %v1561
        %v1563 = vpop.f32.mrb[0].mxu0
        %1564 = vmatprep.mubr.bf16.mxu0 0
        %1565 = vmatmul.mubr.bf16.gmra.mrb[0].mxu0 %v1481
        %v1566 = vpop.f32.mrb[0].mxu0
        %v1567 = vadd.f32 0.0, %v1566
        %v1568 = vpop.f32.mrb[0].mxu0
        %v1569 = vpop.f32.mrb[0].mxu0
        %v1570 = vadd.f32 0.0, %v1569
        %v1571 = vpop.f32.mrb[0].mxu0
        %1572 = vmatprep.mubr.bf16.mxu0 0
        %1573 = vmatmul.mubr.bf16.gmra.mrb[0].mxu0 %v1484
        %v1574 = vpop.f32.mrb[0].mxu0
        %v1575 = vadd.f32 0.0, %v1574
        %v1576 = vpop.f32.mrb[0].mxu0
        %v1577 = vpop.f32.mrb[0].mxu0
        %v1578 = vadd.f32 0.0, %v1577
        %v1579 = vpop.f32.mrb[0].mxu0
        %1580 = vmatprep.mubr.bf16.mxu0 0
        %1581 = vmatmul.mubr.bf16.gmra.mrb[0].mxu0 %v1487
        %v1582 = vpop.f32.mrb[0].mxu0
        %v1583 = vadd.f32 0.0, %v1582
        %v1584 = vpop.f32.mrb[0].mxu0
        %v1585 = vpop.f32.mrb[0].mxu0
        %v1586 = vadd.f32 0.0, %v1585
        %v1587 = vpop.f32.mrb[0].mxu0
        %1588 = vdwg.mxu0
        %v1589 = vadd.f32 %v1207, %v1527
        %v1590 = vadd.f32 %v1208, %v1530
        %v1591 = vadd.f32 %v1209, %v1535
        %v1592 = vadd.f32 %v1210, %v1538
        %v1593 = vadd.f32 %v1211, %v1543
        %v1594 = vadd.f32 %v1212, %v1546
        %v1595 = vadd.f32 %v1213, %v1551
        %v1596 = vadd.f32 %v1214, %v1554
        %v1597 = vadd.f32 %v1215, %v1559
        %v1598 = vadd.f32 %v1216, %v1562
        %v1599 = vadd.f32 %v1217, %v1567
        %v1600 = vadd.f32 %v1218, %v1570
        %v1601 = vadd.f32 %v1219, %v1575
        %v1602 = vadd.f32 %v1220, %v1578
        %v1603 = vadd.f32 %v1221, %v1583
        %v1604 = vadd.f32 %v1222, %v1586
        %v1605 = vld [vmem:[%s1024] sm:$0xe]
        %v1606 = vld [vmem:[%s1024 + $0xc] sm:$0xe]
        %v1607 = vld [vmem:[%s1024 + $0x18] sm:$0xe]
        %v1608 = vld [vmem:[%s1024 + $0x24] sm:$0xe]
        %v1609 = vld [vmem:[%s1024 + $0x30] sm:$0xe]
        %v1610 = vld [vmem:[%s1024 + $0x3c] sm:$0xe]
        %v1611 = vld [vmem:[%s1024 + $0x48] sm:$0xe]
        %v1612 = vld [vmem:[%s1024 + $0x54] sm:$0xe]
        %v1637 = vrot.slane %v1605, 5
        %v1638 = vrot.slane %v1637, 4
        %v1639 = vrot.slane %v1224, 5
        %v1640 = vsel %vm798, %v1638, %v1639
        %v1641 = vrot.slane %v1639, 4
        %v1642 = vrot.slane %v1225, 5
        %v1643 = vsel %vm798, %v1641, %v1642
        %v1644 = vrot.slane %v1606, 5
        %v1645 = vrot.slane %v1644, 4
        %v1646 = vrot.slane %v1227, 5
        %v1647 = vsel %vm798, %v1645, %v1646
        %v1648 = vrot.slane %v1646, 4
        %v1649 = vrot.slane %v1228, 5
        %v1650 = vsel %vm798, %v1648, %v1649
        %v1651 = vrot.slane %v1607, 5
        %v1652 = vrot.slane %v1651, 4
        %v1653 = vrot.slane %v1230, 5
        %v1654 = vsel %vm798, %v1652, %v1653
        %v1655 = vrot.slane %v1653, 4
        %v1656 = vrot.slane %v1231, 5
        %v1657 = vsel %vm798, %v1655, %v1656
        %v1658 = vrot.slane %v1608, 5
        %v1659 = vrot.slane %v1658, 4
        %v1660 = vrot.slane %v1233, 5
        %v1661 = vsel %vm798, %v1659, %v1660
        %v1662 = vrot.slane %v1660, 4
        %v1663 = vrot.slane %v1234, 5
        %v1664 = vsel %vm798, %v1662, %v1663
        %v1665 = vrot.slane %v1609, 5
        %v1666 = vrot.slane %v1665, 4
        %v1667 = vrot.slane %v1236, 5
        %v1668 = vsel %vm798, %v1666, %v1667
        %v1669 = vrot.slane %v1667, 4
        %v1670 = vrot.slane %v1237, 5
        %v1671 = vsel %vm798, %v1669, %v1670
        %v1672 = vrot.slane %v1610, 5
        %v1673 = vrot.slane %v1672, 4
        %v1674 = vrot.slane %v1239, 5
        %v1675 = vsel %vm798, %v1673, %v1674
        %v1676 = vrot.slane %v1674, 4
        %v1677 = vrot.slane %v1240, 5
        %v1678 = vsel %vm798, %v1676, %v1677
        %v1679 = vrot.slane %v1611, 5
        %v1680 = vrot.slane %v1679, 4
        %v1681 = vrot.slane %v1242, 5
        %v1682 = vsel %vm798, %v1680, %v1681
        %v1683 = vrot.slane %v1681, 4
        %v1684 = vrot.slane %v1243, 5
        %v1685 = vsel %vm798, %v1683, %v1684
        %v1686 = vrot.slane %v1612, 5
        %v1687 = vrot.slane %v1686, 4
        %v1688 = vrot.slane %v1245, 5
        %v1689 = vsel %vm798, %v1687, %v1688
        %v1690 = vrot.slane %v1688, 4
        %v1691 = vrot.slane %v1246, 5
        %v1692 = vsel %vm798, %v1690, %v1691
        %s1693 = scalar_lea.vmem [#allocation5], 10
        %v1694 = vld [vmem:[%s1693] sm:$0x3]
        %v1695 = vunpack.c.l.b16 %v1640
        %v1696 = vunpack.c.l.b16 %v1643
        %v1697 = vunpack.c.l.b16 %v1647
        %v1698 = vunpack.c.l.b16 %v1650
        %v1699 = vunpack.c.l.b16 %v1654
        %v1700 = vunpack.c.l.b16 %v1657
        %v1701 = vunpack.c.l.b16 %v1661
        %v1702 = vunpack.c.l.b16 %v1664
        %v1703 = vunpack.c.l.b16 %v1668
        %v1704 = vunpack.c.l.b16 %v1671
        %v1705 = vunpack.c.l.b16 %v1675
        %v1706 = vunpack.c.l.b16 %v1678
        %v1707 = vunpack.c.l.b16 %v1682
        %v1708 = vunpack.c.l.b16 %v1685
        %v1709 = vunpack.c.l.b16 %v1689
        %v1710 = vunpack.c.l.b16 %v1692
        %v1711 = vpack.c.b16 %v1696, %v1695
        %v1712 = vpack.c.b16 %v1698, %v1697
        %v1713 = vpack.c.b16 %v1700, %v1699
        %v1714 = vpack.c.b16 %v1702, %v1701
        %v1715 = vpack.c.b16 %v1704, %v1703
        %v1716 = vpack.c.b16 %v1706, %v1705
        %v1717 = vpack.c.b16 %v1708, %v1707
        %v1718 = vpack.c.b16 %v1710, %v1709
        %v1720 = vsel %vm482, %v1711, 0
        %v1723 = vsel %vm482, %v1712, 0
        %v1726 = vsel %vm482, %v1713, 0
        %v1729 = vsel %vm482, %v1714, 0
        %v1732 = vsel %vm482, %v1715, 0
        %v1735 = vsel %vm482, %v1716, 0
        %v1738 = vsel %vm482, %v1717, 0
        %v1741 = vsel %vm482, %v1718, 0
        %v1744 = vsel %vm507, %v1694, 0
        %1746 = vmatprep.subr.bf16.mxu0 0
        %1747 = vmatpush1.bf16.msra.mxu0 %v1744
        %1748 = vmatprep.subr.bf16.mxu0 0
        %1749 = vmatpush1.bf16.msra.mxu0 0
        %1750 = vmatprep.subr.bf16.mxu0 0
        %1751 = vmatpush1.bf16.msra.mxu0 0
        %1752 = vmatprep.subr.bf16.mxu0 0
        %1753 = vmatpush1.bf16.msra.mxu0 0
        %1754 = vmatprep.subr.bf16.mxu0 0
        %1755 = vmatpush1.bf16.msra.mxu0 0
        %1756 = vmatprep.subr.bf16.mxu0 0
        %1757 = vmatpush1.bf16.msra.mxu0 0
        %1758 = vmatprep.subr.bf16.mxu0 0
        %1759 = vmatpush1.bf16.msra.mxu0 0
        %1760 = vmatprep.subr.bf16.mxu0 0
        %1761 = vmatpush1.bf16.msra.mxu0 0
        %1762 = vmatprep.subr.bf16.mxu0 0
        %1763 = vmatpush1.bf16.msra.mxu0 0
        %1764 = vmatprep.subr.bf16.mxu0 0
        %1765 = vmatpush1.bf16.msra.mxu0 0
        %1766 = vmatprep.subr.bf16.mxu0 0
        %1767 = vmatpush1.bf16.msra.mxu0 0
        %1768 = vmatprep.subr.bf16.mxu0 0
        %1769 = vmatpush1.bf16.msra.mxu0 0
        %1770 = vmatprep.subr.bf16.mxu0 0
        %1771 = vmatpush1.bf16.msra.mxu0 0
        %1772 = vmatprep.subr.bf16.mxu0 0
        %1773 = vmatpush1.bf16.msra.mxu0 0
        %1774 = vmatprep.subr.bf16.mxu0 0
        %1775 = vmatpush1.bf16.msra.mxu0 0
        %1776 = vmatprep.subr.bf16.mxu0 0
        %1777 = vmatpush1.bf16.msra.mxu0 0
        %1778 = vmatprep.mubr.bf16.mxu0 0
        %1779 = vmatmul.mubr.bf16.gmra.mrb[0].mxu0 %v1720
        %v1780 = vpop.f32.mrb[0].mxu0
        %v1781 = vadd.f32 0.0, %v1780
        %v1782 = vpop.f32.mrb[0].mxu0
        %v1783 = vpop.f32.mrb[0].mxu0
        %v1784 = vadd.f32 0.0, %v1783
        %v1785 = vpop.f32.mrb[0].mxu0
        %1786 = vmatprep.mubr.bf16.mxu0 0
        %1787 = vmatmul.mubr.bf16.gmra.mrb[0].mxu0 %v1723
        %v1788 = vpop.f32.mrb[0].mxu0
        %v1789 = vadd.f32 0.0, %v1788
        %v1790 = vpop.f32.mrb[0].mxu0
        %v1791 = vpop.f32.mrb[0].mxu0
        %v1792 = vadd.f32 0.0, %v1791
        %v1793 = vpop.f32.mrb[0].mxu0
        %1794 = vmatprep.mubr.bf16.mxu0 0
        %1795 = vmatmul.mubr.bf16.gmra.mrb[0].mxu0 %v1726
        %v1796 = vpop.f32.mrb[0].mxu0
        %v1797 = vadd.f32 0.0, %v1796
        %v1798 = vpop.f32.mrb[0].mxu0
        %v1799 = vpop.f32.mrb[0].mxu0
        %v1800 = vadd.f32 0.0, %v1799
        %v1801 = vpop.f32.mrb[0].mxu0
        %1802 = vmatprep.mubr.bf16.mxu0 0
        %1803 = vmatmul.mubr.bf16.gmra.mrb[0].mxu0 %v1729
        %v1804 = vpop.f32.mrb[0].mxu0
        %v1805 = vadd.f32 0.0, %v1804
        %v1806 = vpop.f32.mrb[0].mxu0
        %v1807 = vpop.f32.mrb[0].mxu0
        %v1808 = vadd.f32 0.0, %v1807
        %v1809 = vpop.f32.mrb[0].mxu0
        %1810 = vmatprep.mubr.bf16.mxu0 0
        %1811 = vmatmul.mubr.bf16.gmra.mrb[0].mxu0 %v1732
        %v1812 = vpop.f32.mrb[0].mxu0
        %v1813 = vadd.f32 0.0, %v1812
        %v1814 = vpop.f32.mrb[0].mxu0
        %v1815 = vpop.f32.mrb[0].mxu0
        %v1816 = vadd.f32 0.0, %v1815
        %v1817 = vpop.f32.mrb[0].mxu0
        %1818 = vmatprep.mubr.bf16.mxu0 0
        %1819 = vmatmul.mubr.bf16.gmra.mrb[0].mxu0 %v1735
        %v1820 = vpop.f32.mrb[0].mxu0
        %v1821 = vadd.f32 0.0, %v1820
        %v1822 = vpop.f32.mrb[0].mxu0
        %v1823 = vpop.f32.mrb[0].mxu0
        %v1824 = vadd.f32 0.0, %v1823
        %v1825 = vpop.f32.mrb[0].mxu0
        %1826 = vmatprep.mubr.bf16.mxu0 0
        %1827 = vmatmul.mubr.bf16.gmra.mrb[0].mxu0 %v1738
        %v1828 = vpop.f32.mrb[0].mxu0
        %v1829 = vadd.f32 0.0, %v1828
        %v1830 = vpop.f32.mrb[0].mxu0
        %v1831 = vpop.f32.mrb[0].mxu0
        %v1832 = vadd.f32 0.0, %v1831
        %v1833 = vpop.f32.mrb[0].mxu0
        %1834 = vmatprep.mubr.bf16.mxu0 0
        %1835 = vmatmul.mubr.bf16.gmra.mrb[0].mxu0 %v1741
        %v1836 = vpop.f32.mrb[0].mxu0
        %v1837 = vadd.f32 0.0, %v1836
        %v1838 = vpop.f32.mrb[0].mxu0
        %v1839 = vpop.f32.mrb[0].mxu0
        %v1840 = vadd.f32 0.0, %v1839
        %v1841 = vpop.f32.mrb[0].mxu0
        %1842 = vdwg.mxu0
        %v1843 = vadd.f32 %v1589, %v1781
        %v1844 = vadd.f32 %v1590, %v1784
        %v1845 = vadd.f32 %v1591, %v1789
        %v1846 = vadd.f32 %v1592, %v1792
        %v1847 = vadd.f32 %v1593, %v1797
        %v1848 = vadd.f32 %v1594, %v1800
        %v1849 = vadd.f32 %v1595, %v1805
        %v1850 = vadd.f32 %v1596, %v1808
        %v1851 = vadd.f32 %v1597, %v1813
        %v1852 = vadd.f32 %v1598, %v1816
        %v1853 = vadd.f32 %v1599, %v1821
        %v1854 = vadd.f32 %v1600, %v1824
        %v1855 = vadd.f32 %v1601, %v1829
        %v1856 = vadd.f32 %v1602, %v1832
        %v1857 = vadd.f32 %v1603, %v1837
        %v1858 = vadd.f32 %v1604, %v1840
        %s1859 = sadd.s32 %s232, 2
        %s1860 = smul.u32 %s1859, 3
        %s1861 = smul.addr %s1860, 4
        %s1862 = scalar_lea.vmem %s199, %s1861 [#allocation2]
        %v1863 = vld [vmem:[%s1862] sm:$0xf]
        %v1864 = vld [vmem:[%s1862 + $0x4] sm:$0xf]
        %v1865 = vld [vmem:[%s1862 + $0xc] sm:$0xf]
        %v1866 = vld [vmem:[%s1862 + $0x10] sm:$0xf]
        %v1867 = vld [vmem:[%s1862 + $0x18] sm:$0xf]
        %v1868 = vld [vmem:[%s1862 + $0x1c] sm:$0xf]
        %v1869 = vld [vmem:[%s1862 + $0x24] sm:$0xf]
        %v1870 = vld [vmem:[%s1862 + $0x28] sm:$0xf]
        %v1871 = vld [vmem:[%s1862 + $0x30] sm:$0xf]
        %v1872 = vld [vmem:[%s1862 + $0x34] sm:$0xf]
        %v1873 = vld [vmem:[%s1862 + $0x3c] sm:$0xf]
        %v1874 = vld [vmem:[%s1862 + $0x40] sm:$0xf]
        %v1875 = vld [vmem:[%s1862 + $0x48] sm:$0xf]
        %v1876 = vld [vmem:[%s1862 + $0x4c] sm:$0xf]
        %v1877 = vld [vmem:[%s1862 + $0x54] sm:$0xf]
        %v1878 = vld [vmem:[%s1862 + $0x58] sm:$0xf]
        %s1879 = scalar_lea.vmem [#allocation5], 12
        %v1880 = vld [vmem:[%s1879] sm:$0x3]
        %v1897 = vunpack.c.l.b16 %v1863
        %v1898 = vunpack.c.l.b16 %v1864
        %v1899 = vunpack.c.l.b16 %v1865
        %v1900 = vunpack.c.l.b16 %v1866
        %v1901 = vunpack.c.l.b16 %v1867
        %v1902 = vunpack.c.l.b16 %v1868
        %v1903 = vunpack.c.l.b16 %v1869
        %v1904 = vunpack.c.l.b16 %v1870
        %v1905 = vunpack.c.l.b16 %v1871
        %v1906 = vunpack.c.l.b16 %v1872
        %v1907 = vunpack.c.l.b16 %v1873
        %v1908 = vunpack.c.l.b16 %v1874
        %v1909 = vunpack.c.l.b16 %v1875
        %v1910 = vunpack.c.l.b16 %v1876
        %v1911 = vunpack.c.l.b16 %v1877
        %v1912 = vunpack.c.l.b16 %v1878
        %v1913 = vpack.c.b16 %v1898, %v1897
        %v1914 = vpack.c.b16 %v1900, %v1899
        %v1915 = vpack.c.b16 %v1902, %v1901
        %v1916 = vpack.c.b16 %v1904, %v1903
        %v1917 = vpack.c.b16 %v1906, %v1905
        %v1918 = vpack.c.b16 %v1908, %v1907
        %v1919 = vpack.c.b16 %v1910, %v1909
        %v1920 = vpack.c.b16 %v1912, %v1911
        %v1922 = vsel %vm482, %v1913, 0
        %v1925 = vsel %vm482, %v1914, 0
        %v1928 = vsel %vm482, %v1915, 0
        %v1931 = vsel %vm482, %v1916, 0
        %v1934 = vsel %vm482, %v1917, 0
        %v1937 = vsel %vm482, %v1918, 0
        %v1940 = vsel %vm482, %v1919, 0
        %v1943 = vsel %vm482, %v1920, 0
        %v1946 = vsel %vm507, %v1880, 0
        %1948 = vmatprep.subr.bf16.mxu0 0
        %1949 = vmatpush1.bf16.msra.mxu0 %v1946
        %1950 = vmatprep.subr.bf16.mxu0 0
        %1951 = vmatpush1.bf16.msra.mxu0 0
        %1952 = vmatprep.subr.bf16.mxu0 0
        %1953 = vmatpush1.bf16.msra.mxu0 0
        %1954 = vmatprep.subr.bf16.mxu0 0
        %1955 = vmatpush1.bf16.msra.mxu0 0
        %1956 = vmatprep.subr.bf16.mxu0 0
        %1957 = vmatpush1.bf16.msra.mxu0 0
        %1958 = vmatprep.subr.bf16.mxu0 0
        %1959 = vmatpush1.bf16.msra.mxu0 0
        %1960 = vmatprep.subr.bf16.mxu0 0
        %1961 = vmatpush1.bf16.msra.mxu0 0
        %1962 = vmatprep.subr.bf16.mxu0 0
        %1963 = vmatpush1.bf16.msra.mxu0 0
        %1964 = vmatprep.subr.bf16.mxu0 0
        %1965 = vmatpush1.bf16.msra.mxu0 0
        %1966 = vmatprep.subr.bf16.mxu0 0
        %1967 = vmatpush1.bf16.msra.mxu0 0
        %1968 = vmatprep.subr.bf16.mxu0 0
        %1969 = vmatpush1.bf16.msra.mxu0 0
        %1970 = vmatprep.subr.bf16.mxu0 0
        %1971 = vmatpush1.bf16.msra.mxu0 0
        %1972 = vmatprep.subr.bf16.mxu0 0
        %1973 = vmatpush1.bf16.msra.mxu0 0
        %1974 = vmatprep.subr.bf16.mxu0 0
        %1975 = vmatpush1.bf16.msra.mxu0 0
        %1976 = vmatprep.subr.bf16.mxu0 0
        %1977 = vmatpush1.bf16.msra.mxu0 0
        %1978 = vmatprep.subr.bf16.mxu0 0
        %1979 = vmatpush1.bf16.msra.mxu0 0
        %1980 = vmatprep.mubr.bf16.mxu0 0
        %1981 = vmatmul.mubr.bf16.gmra.mrb[0].mxu0 %v1922
        %v1982 = vpop.f32.mrb[0].mxu0
        %v1983 = vadd.f32 0.0, %v1982
        %v1984 = vpop.f32.mrb[0].mxu0
        %v1985 = vpop.f32.mrb[0].mxu0
        %v1986 = vadd.f32 0.0, %v1985
        %v1987 = vpop.f32.mrb[0].mxu0
        %1988 = vmatprep.mubr.bf16.mxu0 0
        %1989 = vmatmul.mubr.bf16.gmra.mrb[0].mxu0 %v1925
        %v1990 = vpop.f32.mrb[0].mxu0
        %v1991 = vadd.f32 0.0, %v1990
        %v1992 = vpop.f32.mrb[0].mxu0
        %v1993 = vpop.f32.mrb[0].mxu0
        %v1994 = vadd.f32 0.0, %v1993
        %v1995 = vpop.f32.mrb[0].mxu0
        %1996 = vmatprep.mubr.bf16.mxu0 0
        %1997 = vmatmul.mubr.bf16.gmra.mrb[0].mxu0 %v1928
        %v1998 = vpop.f32.mrb[0].mxu0
        %v1999 = vadd.f32 0.0, %v1998
        %v2000 = vpop.f32.mrb[0].mxu0
        %v2001 = vpop.f32.mrb[0].mxu0
        %v2002 = vadd.f32 0.0, %v2001
        %v2003 = vpop.f32.mrb[0].mxu0
        %2004 = vmatprep.mubr.bf16.mxu0 0
        %2005 = vmatmul.mubr.bf16.gmra.mrb[0].mxu0 %v1931
        %v2006 = vpop.f32.mrb[0].mxu0
        %v2007 = vadd.f32 0.0, %v2006
        %v2008 = vpop.f32.mrb[0].mxu0
        %v2009 = vpop.f32.mrb[0].mxu0
        %v2010 = vadd.f32 0.0, %v2009
        %v2011 = vpop.f32.mrb[0].mxu0
        %2012 = vmatprep.mubr.bf16.mxu0 0
        %2013 = vmatmul.mubr.bf16.gmra.mrb[0].mxu0 %v1934
        %v2014 = vpop.f32.mrb[0].mxu0
        %v2015 = vadd.f32 0.0, %v2014
        %v2016 = vpop.f32.mrb[0].mxu0
        %v2017 = vpop.f32.mrb[0].mxu0
        %v2018 = vadd.f32 0.0, %v2017
        %v2019 = vpop.f32.mrb[0].mxu0
        %2020 = vmatprep.mubr.bf16.mxu0 0
        %2021 = vmatmul.mubr.bf16.gmra.mrb[0].mxu0 %v1937
        %v2022 = vpop.f32.mrb[0].mxu0
        %v2023 = vadd.f32 0.0, %v2022
        %v2024 = vpop.f32.mrb[0].mxu0
        %v2025 = vpop.f32.mrb[0].mxu0
        %v2026 = vadd.f32 0.0, %v2025
        %v2027 = vpop.f32.mrb[0].mxu0
        %2028 = vmatprep.mubr.bf16.mxu0 0
        %2029 = vmatmul.mubr.bf16.gmra.mrb[0].mxu0 %v1940
        %v2030 = vpop.f32.mrb[0].mxu0
        %v2031 = vadd.f32 0.0, %v2030
        %v2032 = vpop.f32.mrb[0].mxu0
        %v2033 = vpop.f32.mrb[0].mxu0
        %v2034 = vadd.f32 0.0, %v2033
        %v2035 = vpop.f32.mrb[0].mxu0
        %2036 = vmatprep.mubr.bf16.mxu0 0
        %2037 = vmatmul.mubr.bf16.gmra.mrb[0].mxu0 %v1943
        %v2038 = vpop.f32.mrb[0].mxu0
        %v2039 = vadd.f32 0.0, %v2038
        %v2040 = vpop.f32.mrb[0].mxu0
        %v2041 = vpop.f32.mrb[0].mxu0
        %v2042 = vadd.f32 0.0, %v2041
        %v2043 = vpop.f32.mrb[0].mxu0
        %2044 = vdwg.mxu0
        %v2045 = vadd.f32 %v1843, %v1983
        %v2046 = vadd.f32 %v1844, %v1986
        %v2047 = vadd.f32 %v1845, %v1991
        %v2048 = vadd.f32 %v1846, %v1994
        %v2049 = vadd.f32 %v1847, %v1999
        %v2050 = vadd.f32 %v1848, %v2002
        %v2051 = vadd.f32 %v1849, %v2007
        %v2052 = vadd.f32 %v1850, %v2010
        %v2053 = vadd.f32 %v1851, %v2015
        %v2054 = vadd.f32 %v1852, %v2018
        %v2055 = vadd.f32 %v1853, %v2023
        %v2056 = vadd.f32 %v1854, %v2026
        %v2057 = vadd.f32 %v1855, %v2031
        %v2058 = vadd.f32 %v1856, %v2034
        %v2059 = vadd.f32 %v1857, %v2039
        %v2060 = vadd.f32 %v1858, %v2042
        %v2061 = vld [vmem:[%s1862] sm:$0xf]
        %v2062 = vld [vmem:[%s1862 + $0x4] sm:$0xf]
        %v2063 = vld [vmem:[%s1862 + $0x8] sm:$0x1]
        %v2064 = vld [vmem:[%s1862 + $0xc] sm:$0xf]
        %v2065 = vld [vmem:[%s1862 + $0x10] sm:$0xf]
        %v2066 = vld [vmem:[%s1862 + $0x14] sm:$0x1]
        %v2067 = vld [vmem:[%s1862 + $0x18] sm:$0xf]
        %v2068 = vld [vmem:[%s1862 + $0x1c] sm:$0xf]
        %v2069 = vld [vmem:[%s1862 + $0x20] sm:$0x1]
        %v2070 = vld [vmem:[%s1862 + $0x24] sm:$0xf]
        %v2071 = vld [vmem:[%s1862 + $0x28] sm:$0xf]
        %v2072 = vld [vmem:[%s1862 + $0x2c] sm:$0x1]
        %v2073 = vld [vmem:[%s1862 + $0x30] sm:$0xf]
        %v2074 = vld [vmem:[%s1862 + $0x34] sm:$0xf]
        %v2075 = vld [vmem:[%s1862 + $0x38] sm:$0x1]
        %v2076 = vld [vmem:[%s1862 + $0x3c] sm:$0xf]
        %v2077 = vld [vmem:[%s1862 + $0x40] sm:$0xf]
        %v2078 = vld [vmem:[%s1862 + $0x44] sm:$0x1]
        %v2079 = vld [vmem:[%s1862 + $0x48] sm:$0xf]
        %v2080 = vld [vmem:[%s1862 + $0x4c] sm:$0xf]
        %v2081 = vld [vmem:[%s1862 + $0x50] sm:$0x1]
        %v2082 = vld [vmem:[%s1862 + $0x54] sm:$0xf]
        %v2083 = vld [vmem:[%s1862 + $0x58] sm:$0xf]
        %v2084 = vld [vmem:[%s1862 + $0x5c] sm:$0x1]
        %v2086 = vshrl.u32 %v2061, 16
        %v2088 = vrot.slane %v2086, 4
        %v2089 = vshll.u32 %v2061, 16
        %v2091 = vrot.slane %v2089, 5
        %v2092 = vor.u32 %v2088, %v2091
        %v2093 = vrot.slane %v2092, 4
        %v2095 = vshll.u32 %v2062, 16
        %v2097 = vrot.slane %v2095, 5
        %v2098 = vsel %vm263, %v2093, %v2097
        %v2099 = vshrl.u32 %v2062, 16
        %v2101 = vrot.slane %v2099, 4
        %v2102 = vor.u32 %v2101, %v2097
        %v2103 = vrot.slane %v2102, 4
        %v2105 = vshll.u32 %v2063, 16
        %v2107 = vrot.slane %v2105, 5
        %v2108 = vsel %vm263, %v2103, %v2107
        %v2110 = vshrl.u32 %v2064, 16
        %v2112 = vrot.slane %v2110, 4
        %v2113 = vshll.u32 %v2064, 16
        %v2115 = vrot.slane %v2113, 5
        %v2116 = vor.u32 %v2112, %v2115
        %v2117 = vrot.slane %v2116, 4
        %v2119 = vshll.u32 %v2065, 16
        %v2121 = vrot.slane %v2119, 5
        %v2122 = vsel %vm263, %v2117, %v2121
        %v2123 = vshrl.u32 %v2065, 16
        %v2125 = vrot.slane %v2123, 4
        %v2126 = vor.u32 %v2125, %v2121
        %v2127 = vrot.slane %v2126, 4
        %v2129 = vshll.u32 %v2066, 16
        %v2131 = vrot.slane %v2129, 5
        %v2132 = vsel %vm263, %v2127, %v2131
        %v2134 = vshrl.u32 %v2067, 16
        %v2136 = vrot.slane %v2134, 4
        %v2137 = vshll.u32 %v2067, 16
        %v2139 = vrot.slane %v2137, 5
        %v2140 = vor.u32 %v2136, %v2139
        %v2141 = vrot.slane %v2140, 4
        %v2143 = vshll.u32 %v2068, 16
        %v2145 = vrot.slane %v2143, 5
        %v2146 = vsel %vm263, %v2141, %v2145
        %v2147 = vshrl.u32 %v2068, 16
        %v2149 = vrot.slane %v2147, 4
        %v2150 = vor.u32 %v2149, %v2145
        %v2151 = vrot.slane %v2150, 4
        %v2153 = vshll.u32 %v2069, 16
        %v2155 = vrot.slane %v2153, 5
        %v2156 = vsel %vm263, %v2151, %v2155
        %v2158 = vshrl.u32 %v2070, 16
        %v2160 = vrot.slane %v2158, 4
        %v2161 = vshll.u32 %v2070, 16
        %v2163 = vrot.slane %v2161, 5
        %v2164 = vor.u32 %v2160, %v2163
        %v2165 = vrot.slane %v2164, 4
        %v2167 = vshll.u32 %v2071, 16
        %v2169 = vrot.slane %v2167, 5
        %v2170 = vsel %vm263, %v2165, %v2169
        %v2171 = vshrl.u32 %v2071, 16
        %v2173 = vrot.slane %v2171, 4
        %v2174 = vor.u32 %v2173, %v2169
        %v2175 = vrot.slane %v2174, 4
        %v2177 = vshll.u32 %v2072, 16
        %v2179 = vrot.slane %v2177, 5
        %v2180 = vsel %vm263, %v2175, %v2179
        %v2182 = vshrl.u32 %v2073, 16
        %v2184 = vrot.slane %v2182, 4
        %v2185 = vshll.u32 %v2073, 16
        %v2187 = vrot.slane %v2185, 5
        %v2188 = vor.u32 %v2184, %v2187
        %v2189 = vrot.slane %v2188, 4
        %v2191 = vshll.u32 %v2074, 16
        %v2193 = vrot.slane %v2191, 5
        %v2194 = vsel %vm263, %v2189, %v2193
        %v2195 = vshrl.u32 %v2074, 16
        %v2197 = vrot.slane %v2195, 4
        %v2198 = vor.u32 %v2197, %v2193
        %v2199 = vrot.slane %v2198, 4
        %v2201 = vshll.u32 %v2075, 16
        %v2203 = vrot.slane %v2201, 5
        %v2204 = vsel %vm263, %v2199, %v2203
        %v2206 = vshrl.u32 %v2076, 16
        %v2208 = vrot.slane %v2206, 4
        %v2209 = vshll.u32 %v2076, 16
        %v2211 = vrot.slane %v2209, 5
        %v2212 = vor.u32 %v2208, %v2211
        %v2213 = vrot.slane %v2212, 4
        %v2215 = vshll.u32 %v2077, 16
        %v2217 = vrot.slane %v2215, 5
        %v2218 = vsel %vm263, %v2213, %v2217
        %v2219 = vshrl.u32 %v2077, 16
        %v2221 = vrot.slane %v2219, 4
        %v2222 = vor.u32 %v2221, %v2217
        %v2223 = vrot.slane %v2222, 4
        %v2225 = vshll.u32 %v2078, 16
        %v2227 = vrot.slane %v2225, 5
        %v2228 = vsel %vm263, %v2223, %v2227
        %v2230 = vshrl.u32 %v2079, 16
        %v2232 = vrot.slane %v2230, 4
        %v2233 = vshll.u32 %v2079, 16
        %v2235 = vrot.slane %v2233, 5
        %v2236 = vor.u32 %v2232, %v2235
        %v2237 = vrot.slane %v2236, 4
        %v2239 = vshll.u32 %v2080, 16
        %v2241 = vrot.slane %v2239, 5
        %v2242 = vsel %vm263, %v2237, %v2241
        %v2243 = vshrl.u32 %v2080, 16
        %v2245 = vrot.slane %v2243, 4
        %v2246 = vor.u32 %v2245, %v2241
        %v2247 = vrot.slane %v2246, 4
        %v2249 = vshll.u32 %v2081, 16
        %v2251 = vrot.slane %v2249, 5
        %v2252 = vsel %vm263, %v2247, %v2251
        %v2254 = vshrl.u32 %v2082, 16
        %v2256 = vrot.slane %v2254, 4
        %v2257 = vshll.u32 %v2082, 16
        %v2259 = vrot.slane %v2257, 5
        %v2260 = vor.u32 %v2256, %v2259
        %v2261 = vrot.slane %v2260, 4
        %v2263 = vshll.u32 %v2083, 16
        %v2265 = vrot.slane %v2263, 5
        %v2266 = vsel %vm263, %v2261, %v2265
        %v2267 = vshrl.u32 %v2083, 16
        %v2269 = vrot.slane %v2267, 4
        %v2270 = vor.u32 %v2269, %v2265
        %v2271 = vrot.slane %v2270, 4
        %v2273 = vshll.u32 %v2084, 16
        %v2275 = vrot.slane %v2273, 5
        %v2276 = vsel %vm263, %v2271, %v2275
        %s2277 = scalar_lea.vmem [#allocation5], 14
        %v2278 = vld [vmem:[%s2277] sm:$0x3]
        %v2279 = vunpack.c.l.b16 %v2098
        %v2280 = vunpack.c.l.b16 %v2108
        %v2281 = vunpack.c.l.b16 %v2122
        %v2282 = vunpack.c.l.b16 %v2132
        %v2283 = vunpack.c.l.b16 %v2146
        %v2284 = vunpack.c.l.b16 %v2156
        %v2285 = vunpack.c.l.b16 %v2170
        %v2286 = vunpack.c.l.b16 %v2180
        %v2287 = vunpack.c.l.b16 %v2194
        %v2288 = vunpack.c.l.b16 %v2204
        %v2289 = vunpack.c.l.b16 %v2218
        %v2290 = vunpack.c.l.b16 %v2228
        %v2291 = vunpack.c.l.b16 %v2242
        %v2292 = vunpack.c.l.b16 %v2252
        %v2293 = vunpack.c.l.b16 %v2266
        %v2294 = vunpack.c.l.b16 %v2276
        %v2295 = vpack.c.b16 %v2280, %v2279
        %v2296 = vpack.c.b16 %v2282, %v2281
        %v2297 = vpack.c.b16 %v2284, %v2283
        %v2298 = vpack.c.b16 %v2286, %v2285
        %v2299 = vpack.c.b16 %v2288, %v2287
        %v2300 = vpack.c.b16 %v2290, %v2289
        %v2301 = vpack.c.b16 %v2292, %v2291
        %v2302 = vpack.c.b16 %v2294, %v2293
        %v2304 = vsel %vm482, %v2295, 0
        %v2307 = vsel %vm482, %v2296, 0
        %v2310 = vsel %vm482, %v2297, 0
        %v2313 = vsel %vm482, %v2298, 0
        %v2316 = vsel %vm482, %v2299, 0
        %v2319 = vsel %vm482, %v2300, 0
        %v2322 = vsel %vm482, %v2301, 0
        %v2325 = vsel %vm482, %v2302, 0
        %v2328 = vsel %vm507, %v2278, 0
        %2330 = vmatprep.subr.bf16.mxu0 0
        %2331 = vmatpush1.bf16.msra.mxu0 %v2328
        %2332 = vmatprep.subr.bf16.mxu0 0
        %2333 = vmatpush1.bf16.msra.mxu0 0
        %2334 = vmatprep.subr.bf16.mxu0 0
        %2335 = vmatpush1.bf16.msra.mxu0 0
        %2336 = vmatprep.subr.bf16.mxu0 0
        %2337 = vmatpush1.bf16.msra.mxu0 0
        %2338 = vmatprep.subr.bf16.mxu0 0
        %2339 = vmatpush1.bf16.msra.mxu0 0
        %2340 = vmatprep.subr.bf16.mxu0 0
        %2341 = vmatpush1.bf16.msra.mxu0 0
        %2342 = vmatprep.subr.bf16.mxu0 0
        %2343 = vmatpush1.bf16.msra.mxu0 0
        %2344 = vmatprep.subr.bf16.mxu0 0
        %2345 = vmatpush1.bf16.msra.mxu0 0
        %2346 = vmatprep.subr.bf16.mxu0 0
        %2347 = vmatpush1.bf16.msra.mxu0 0
        %2348 = vmatprep.subr.bf16.mxu0 0
        %2349 = vmatpush1.bf16.msra.mxu0 0
        %2350 = vmatprep.subr.bf16.mxu0 0
        %2351 = vmatpush1.bf16.msra.mxu0 0
        %2352 = vmatprep.subr.bf16.mxu0 0
        %2353 = vmatpush1.bf16.msra.mxu0 0
        %2354 = vmatprep.subr.bf16.mxu0 0
        %2355 = vmatpush1.bf16.msra.mxu0 0
        %2356 = vmatprep.subr.bf16.mxu0 0
        %2357 = vmatpush1.bf16.msra.mxu0 0
        %2358 = vmatprep.subr.bf16.mxu0 0
        %2359 = vmatpush1.bf16.msra.mxu0 0
        %2360 = vmatprep.subr.bf16.mxu0 0
        %2361 = vmatpush1.bf16.msra.mxu0 0
        %2362 = vmatprep.mubr.bf16.mxu0 0
        %2363 = vmatmul.mubr.bf16.gmra.mrb[0].mxu0 %v2304
        %v2364 = vpop.f32.mrb[0].mxu0
        %v2365 = vadd.f32 0.0, %v2364
        %v2366 = vpop.f32.mrb[0].mxu0
        %v2367 = vpop.f32.mrb[0].mxu0
        %v2368 = vadd.f32 0.0, %v2367
        %v2369 = vpop.f32.mrb[0].mxu0
        %2370 = vmatprep.mubr.bf16.mxu0 0
        %2371 = vmatmul.mubr.bf16.gmra.mrb[0].mxu0 %v2307
        %v2372 = vpop.f32.mrb[0].mxu0
        %v2373 = vadd.f32 0.0, %v2372
        %v2374 = vpop.f32.mrb[0].mxu0
        %v2375 = vpop.f32.mrb[0].mxu0
        %v2376 = vadd.f32 0.0, %v2375
        %v2377 = vpop.f32.mrb[0].mxu0
        %2378 = vmatprep.mubr.bf16.mxu0 0
        %2379 = vmatmul.mubr.bf16.gmra.mrb[0].mxu0 %v2310
        %v2380 = vpop.f32.mrb[0].mxu0
        %v2381 = vadd.f32 0.0, %v2380
        %v2382 = vpop.f32.mrb[0].mxu0
        %v2383 = vpop.f32.mrb[0].mxu0
        %v2384 = vadd.f32 0.0, %v2383
        %v2385 = vpop.f32.mrb[0].mxu0
        %2386 = vmatprep.mubr.bf16.mxu0 0
        %2387 = vmatmul.mubr.bf16.gmra.mrb[0].mxu0 %v2313
        %v2388 = vpop.f32.mrb[0].mxu0
        %v2389 = vadd.f32 0.0, %v2388
        %v2390 = vpop.f32.mrb[0].mxu0
        %v2391 = vpop.f32.mrb[0].mxu0
        %v2392 = vadd.f32 0.0, %v2391
        %v2393 = vpop.f32.mrb[0].mxu0
        %2394 = vmatprep.mubr.bf16.mxu0 0
        %2395 = vmatmul.mubr.bf16.gmra.mrb[0].mxu0 %v2316
        %v2396 = vpop.f32.mrb[0].mxu0
        %v2397 = vadd.f32 0.0, %v2396
        %v2398 = vpop.f32.mrb[0].mxu0
        %v2399 = vpop.f32.mrb[0].mxu0
        %v2400 = vadd.f32 0.0, %v2399
        %v2401 = vpop.f32.mrb[0].mxu0
        %2402 = vmatprep.mubr.bf16.mxu0 0
        %2403 = vmatmul.mubr.bf16.gmra.mrb[0].mxu0 %v2319
        %v2404 = vpop.f32.mrb[0].mxu0
        %v2405 = vadd.f32 0.0, %v2404
        %v2406 = vpop.f32.mrb[0].mxu0
        %v2407 = vpop.f32.mrb[0].mxu0
        %v2408 = vadd.f32 0.0, %v2407
        %v2409 = vpop.f32.mrb[0].mxu0
        %2410 = vmatprep.mubr.bf16.mxu0 0
        %2411 = vmatmul.mubr.bf16.gmra.mrb[0].mxu0 %v2322
        %v2412 = vpop.f32.mrb[0].mxu0
        %v2413 = vadd.f32 0.0, %v2412
        %v2414 = vpop.f32.mrb[0].mxu0
        %v2415 = vpop.f32.mrb[0].mxu0
        %v2416 = vadd.f32 0.0, %v2415
        %v2417 = vpop.f32.mrb[0].mxu0
        %2418 = vmatprep.mubr.bf16.mxu0 0
        %2419 = vmatmul.mubr.bf16.gmra.mrb[0].mxu0 %v2325
        %v2420 = vpop.f32.mrb[0].mxu0
        %v2421 = vadd.f32 0.0, %v2420
        %v2422 = vpop.f32.mrb[0].mxu0
        %v2423 = vpop.f32.mrb[0].mxu0
        %v2424 = vadd.f32 0.0, %v2423
        %v2425 = vpop.f32.mrb[0].mxu0
        %2426 = vdwg.mxu0
        %v2427 = vadd.f32 %v2045, %v2365
        %v2428 = vadd.f32 %v2046, %v2368
        %v2429 = vadd.f32 %v2047, %v2373
        %v2430 = vadd.f32 %v2048, %v2376
        %v2431 = vadd.f32 %v2049, %v2381
        %v2432 = vadd.f32 %v2050, %v2384
        %v2433 = vadd.f32 %v2051, %v2389
        %v2434 = vadd.f32 %v2052, %v2392
        %v2435 = vadd.f32 %v2053, %v2397
        %v2436 = vadd.f32 %v2054, %v2400
        %v2437 = vadd.f32 %v2055, %v2405
        %v2438 = vadd.f32 %v2056, %v2408
        %v2439 = vadd.f32 %v2057, %v2413
        %v2440 = vadd.f32 %v2058, %v2416
        %v2441 = vadd.f32 %v2059, %v2421
        %v2442 = vadd.f32 %v2060, %v2424
        %v2443 = vld [vmem:[%s1862] sm:$0xe]
        %v2444 = vld [vmem:[%s1862 + $0xc] sm:$0xe]
        %v2445 = vld [vmem:[%s1862 + $0x18] sm:$0xe]
        %v2446 = vld [vmem:[%s1862 + $0x24] sm:$0xe]
        %v2447 = vld [vmem:[%s1862 + $0x30] sm:$0xe]
        %v2448 = vld [vmem:[%s1862 + $0x3c] sm:$0xe]
        %v2449 = vld [vmem:[%s1862 + $0x48] sm:$0xe]
        %v2450 = vld [vmem:[%s1862 + $0x54] sm:$0xe]
        %v2475 = vrot.slane %v2443, 5
        %v2476 = vrot.slane %v2475, 4
        %v2477 = vrot.slane %v2062, 5
        %v2478 = vsel %vm798, %v2476, %v2477
        %v2479 = vrot.slane %v2477, 4
        %v2480 = vrot.slane %v2063, 5
        %v2481 = vsel %vm798, %v2479, %v2480
        %v2482 = vrot.slane %v2444, 5
        %v2483 = vrot.slane %v2482, 4
        %v2484 = vrot.slane %v2065, 5
        %v2485 = vsel %vm798, %v2483, %v2484
        %v2486 = vrot.slane %v2484, 4
        %v2487 = vrot.slane %v2066, 5
        %v2488 = vsel %vm798, %v2486, %v2487
        %v2489 = vrot.slane %v2445, 5
        %v2490 = vrot.slane %v2489, 4
        %v2491 = vrot.slane %v2068, 5
        %v2492 = vsel %vm798, %v2490, %v2491
        %v2493 = vrot.slane %v2491, 4
        %v2494 = vrot.slane %v2069, 5
        %v2495 = vsel %vm798, %v2493, %v2494
        %v2496 = vrot.slane %v2446, 5
        %v2497 = vrot.slane %v2496, 4
        %v2498 = vrot.slane %v2071, 5
        %v2499 = vsel %vm798, %v2497, %v2498
        %v2500 = vrot.slane %v2498, 4
        %v2501 = vrot.slane %v2072, 5
        %v2502 = vsel %vm798, %v2500, %v2501
        %v2503 = vrot.slane %v2447, 5
        %v2504 = vrot.slane %v2503, 4
        %v2505 = vrot.slane %v2074, 5
        %v2506 = vsel %vm798, %v2504, %v2505
        %v2507 = vrot.slane %v2505, 4
        %v2508 = vrot.slane %v2075, 5
        %v2509 = vsel %vm798, %v2507, %v2508
        %v2510 = vrot.slane %v2448, 5
        %v2511 = vrot.slane %v2510, 4
        %v2512 = vrot.slane %v2077, 5
        %v2513 = vsel %vm798, %v2511, %v2512
        %v2514 = vrot.slane %v2512, 4
        %v2515 = vrot.slane %v2078, 5
        %v2516 = vsel %vm798, %v2514, %v2515
        %v2517 = vrot.slane %v2449, 5
        %v2518 = vrot.slane %v2517, 4
        %v2519 = vrot.slane %v2080, 5
        %v2520 = vsel %vm798, %v2518, %v2519
        %v2521 = vrot.slane %v2519, 4
        %v2522 = vrot.slane %v2081, 5
        %v2523 = vsel %vm798, %v2521, %v2522
        %v2524 = vrot.slane %v2450, 5
        %v2525 = vrot.slane %v2524, 4
        %v2526 = vrot.slane %v2083, 5
        %v2527 = vsel %vm798, %v2525, %v2526
        %v2528 = vrot.slane %v2526, 4
        %v2529 = vrot.slane %v2084, 5
        %v2530 = vsel %vm798, %v2528, %v2529
        %s2531 = scalar_lea.vmem [#allocation5], 16
        %v2532 = vld [vmem:[%s2531] sm:$0x3]
        %v2533 = vunpack.c.l.b16 %v2478
        %v2534 = vunpack.c.l.b16 %v2481
        %v2535 = vunpack.c.l.b16 %v2485
        %v2536 = vunpack.c.l.b16 %v2488
        %v2537 = vunpack.c.l.b16 %v2492
        %v2538 = vunpack.c.l.b16 %v2495
        %v2539 = vunpack.c.l.b16 %v2499
        %v2540 = vunpack.c.l.b16 %v2502
        %v2541 = vunpack.c.l.b16 %v2506
        %v2542 = vunpack.c.l.b16 %v2509
        %v2543 = vunpack.c.l.b16 %v2513
        %v2544 = vunpack.c.l.b16 %v2516
        %v2545 = vunpack.c.l.b16 %v2520
        %v2546 = vunpack.c.l.b16 %v2523
        %v2547 = vunpack.c.l.b16 %v2527
        %v2548 = vunpack.c.l.b16 %v2530
        %v2549 = vpack.c.b16 %v2534, %v2533
        %v2550 = vpack.c.b16 %v2536, %v2535
        %v2551 = vpack.c.b16 %v2538, %v2537
        %v2552 = vpack.c.b16 %v2540, %v2539
        %v2553 = vpack.c.b16 %v2542, %v2541
        %v2554 = vpack.c.b16 %v2544, %v2543
        %v2555 = vpack.c.b16 %v2546, %v2545
        %v2556 = vpack.c.b16 %v2548, %v2547
        %v2558 = vsel %vm482, %v2549, 0
        %v2561 = vsel %vm482, %v2550, 0
        %v2564 = vsel %vm482, %v2551, 0
        %v2567 = vsel %vm482, %v2552, 0
        %v2570 = vsel %vm482, %v2553, 0
        %v2573 = vsel %vm482, %v2554, 0
        %v2576 = vsel %vm482, %v2555, 0
        %v2579 = vsel %vm482, %v2556, 0
        %v2582 = vsel %vm507, %v2532, 0
        %2584 = vmatprep.subr.bf16.mxu0 0
        %2585 = vmatpush1.bf16.msra.mxu0 %v2582
        %2586 = vmatprep.subr.bf16.mxu0 0
        %2587 = vmatpush1.bf16.msra.mxu0 0
        %2588 = vmatprep.subr.bf16.mxu0 0
        %2589 = vmatpush1.bf16.msra.mxu0 0
        %2590 = vmatprep.subr.bf16.mxu0 0
        %2591 = vmatpush1.bf16.msra.mxu0 0
        %2592 = vmatprep.subr.bf16.mxu0 0
        %2593 = vmatpush1.bf16.msra.mxu0 0
        %2594 = vmatprep.subr.bf16.mxu0 0
        %2595 = vmatpush1.bf16.msra.mxu0 0
        %2596 = vmatprep.subr.bf16.mxu0 0
        %2597 = vmatpush1.bf16.msra.mxu0 0
        %2598 = vmatprep.subr.bf16.mxu0 0
        %2599 = vmatpush1.bf16.msra.mxu0 0
        %2600 = vmatprep.subr.bf16.mxu0 0
        %2601 = vmatpush1.bf16.msra.mxu0 0
        %2602 = vmatprep.subr.bf16.mxu0 0
        %2603 = vmatpush1.bf16.msra.mxu0 0
        %2604 = vmatprep.subr.bf16.mxu0 0
        %2605 = vmatpush1.bf16.msra.mxu0 0
        %2606 = vmatprep.subr.bf16.mxu0 0
        %2607 = vmatpush1.bf16.msra.mxu0 0
        %2608 = vmatprep.subr.bf16.mxu0 0
        %2609 = vmatpush1.bf16.msra.mxu0 0
        %2610 = vmatprep.subr.bf16.mxu0 0
        %2611 = vmatpush1.bf16.msra.mxu0 0
        %2612 = vmatprep.subr.bf16.mxu0 0
        %2613 = vmatpush1.bf16.msra.mxu0 0
        %2614 = vmatprep.subr.bf16.mxu0 0
        %2615 = vmatpush1.bf16.msra.mxu0 0
        %2616 = vmatprep.mubr.bf16.mxu0 0
        %2617 = vmatmul.mubr.bf16.gmra.mrb[0].mxu0 %v2558
        %v2618 = vpop.f32.mrb[0].mxu0
        %v2619 = vadd.f32 0.0, %v2618
        %v2620 = vpop.f32.mrb[0].mxu0
        %v2621 = vpop.f32.mrb[0].mxu0
        %v2622 = vadd.f32 0.0, %v2621
        %v2623 = vpop.f32.mrb[0].mxu0
        %2624 = vmatprep.mubr.bf16.mxu0 0
        %2625 = vmatmul.mubr.bf16.gmra.mrb[0].mxu0 %v2561
        %v2626 = vpop.f32.mrb[0].mxu0
        %v2627 = vadd.f32 0.0, %v2626
        %v2628 = vpop.f32.mrb[0].mxu0
        %v2629 = vpop.f32.mrb[0].mxu0
        %v2630 = vadd.f32 0.0, %v2629
        %v2631 = vpop.f32.mrb[0].mxu0
        %2632 = vmatprep.mubr.bf16.mxu0 0
        %2633 = vmatmul.mubr.bf16.gmra.mrb[0].mxu0 %v2564
        %v2634 = vpop.f32.mrb[0].mxu0
        %v2635 = vadd.f32 0.0, %v2634
        %v2636 = vpop.f32.mrb[0].mxu0
        %v2637 = vpop.f32.mrb[0].mxu0
        %v2638 = vadd.f32 0.0, %v2637
        %v2639 = vpop.f32.mrb[0].mxu0
        %2640 = vmatprep.mubr.bf16.mxu0 0
        %2641 = vmatmul.mubr.bf16.gmra.mrb[0].mxu0 %v2567
        %v2642 = vpop.f32.mrb[0].mxu0
        %v2643 = vadd.f32 0.0, %v2642
        %v2644 = vpop.f32.mrb[0].mxu0
        %v2645 = vpop.f32.mrb[0].mxu0
        %v2646 = vadd.f32 0.0, %v2645
        %v2647 = vpop.f32.mrb[0].mxu0
        %2648 = vmatprep.mubr.bf16.mxu0 0
        %2649 = vmatmul.mubr.bf16.gmra.mrb[0].mxu0 %v2570
        %v2650 = vpop.f32.mrb[0].mxu0
        %v2651 = vadd.f32 0.0, %v2650
        %v2652 = vpop.f32.mrb[0].mxu0
        %v2653 = vpop.f32.mrb[0].mxu0
        %v2654 = vadd.f32 0.0, %v2653
        %v2655 = vpop.f32.mrb[0].mxu0
        %2656 = vmatprep.mubr.bf16.mxu0 0
        %2657 = vmatmul.mubr.bf16.gmra.mrb[0].mxu0 %v2573
        %v2658 = vpop.f32.mrb[0].mxu0
        %v2659 = vadd.f32 0.0, %v2658
        %v2660 = vpop.f32.mrb[0].mxu0
        %v2661 = vpop.f32.mrb[0].mxu0
        %v2662 = vadd.f32 0.0, %v2661
        %v2663 = vpop.f32.mrb[0].mxu0
        %2664 = vmatprep.mubr.bf16.mxu0 0
        %2665 = vmatmul.mubr.bf16.gmra.mrb[0].mxu0 %v2576
        %v2666 = vpop.f32.mrb[0].mxu0
        %v2667 = vadd.f32 0.0, %v2666
        %v2668 = vpop.f32.mrb[0].mxu0
        %v2669 = vpop.f32.mrb[0].mxu0
        %v2670 = vadd.f32 0.0, %v2669
        %v2671 = vpop.f32.mrb[0].mxu0
        %2672 = vmatprep.mubr.bf16.mxu0 0
        %2673 = vmatmul.mubr.bf16.gmra.mrb[0].mxu0 %v2579
        %v2674 = vpop.f32.mrb[0].mxu0
        %v2675 = vadd.f32 0.0, %v2674
        %v2676 = vpop.f32.mrb[0].mxu0
        %v2677 = vpop.f32.mrb[0].mxu0
        %v2678 = vadd.f32 0.0, %v2677
        %v2679 = vpop.f32.mrb[0].mxu0
        %2680 = vdwg.mxu0
        %v2681 = vadd.f32 %v2427, %v2619
        %v2682 = vadd.f32 %v2428, %v2622
        %v2683 = vadd.f32 %v2429, %v2627
        %v2684 = vadd.f32 %v2430, %v2630
        %v2685 = vadd.f32 %v2431, %v2635
        %v2686 = vadd.f32 %v2432, %v2638
        %v2687 = vadd.f32 %v2433, %v2643
        %v2688 = vadd.f32 %v2434, %v2646
        %v2689 = vadd.f32 %v2435, %v2651
        %v2690 = vadd.f32 %v2436, %v2654
        %v2691 = vadd.f32 %v2437, %v2659
        %v2692 = vadd.f32 %v2438, %v2662
        %v2693 = vadd.f32 %v2439, %v2667
        %v2694 = vadd.f32 %v2440, %v2670
        %v2695 = vadd.f32 %v2441, %v2675
        %v2696 = vadd.f32 %v2442, %v2678
        %v2697 = vld [vmem:[#allocation7] sm:$0x1]
        %v2699 = vlaneseq
        %v2700 = vshrl.u32 %v2699, 7
        %v2701 = vsub.s32 0, %v2700
        %v2702 = vrot.slane %v2697, %v2701
        %v2704 = vadd.f32 %v2681, %v2702
        %v2705 = vadd.f32 %v2682, %v2702
        %v2706 = vadd.f32 %v2683, %v2702
        %v2707 = vadd.f32 %v2684, %v2702
        %v2708 = vadd.f32 %v2685, %v2702
        %v2709 = vadd.f32 %v2686, %v2702
        %v2710 = vadd.f32 %v2687, %v2702
        %v2711 = vadd.f32 %v2688, %v2702
        %v2712 = vadd.f32 %v2689, %v2702
        %v2713 = vadd.f32 %v2690, %v2702
        %v2714 = vadd.f32 %v2691, %v2702
        %v2715 = vadd.f32 %v2692, %v2702
        %v2716 = vadd.f32 %v2693, %v2702
        %v2717 = vadd.f32 %v2694, %v2702
        %v2718 = vadd.f32 %v2695, %v2702
        %v2719 = vadd.f32 %v2696, %v2702
        %vm2720 = vcmask 293888
        %2721 = vst.msk [vmem:[%s229] sm:$0xff] %vm2720, %v2704
        %2722 = vst.msk [vmem:[%s229 + $0x8] sm:$0xff] %vm2720, %v2705
        %2723 = vst.msk [vmem:[%s229 + $0x10] sm:$0xff] %vm2720, %v2706
        %2724 = vst.msk [vmem:[%s229 + $0x18] sm:$0xff] %vm2720, %v2707
        %2725 = vst.msk [vmem:[%s229 + $0x20] sm:$0xff] %vm2720, %v2708
        %2726 = vst.msk [vmem:[%s229 + $0x28] sm:$0xff] %vm2720, %v2709
        %2727 = vst.msk [vmem:[%s229 + $0x30] sm:$0xff] %vm2720, %v2710
        %2728 = vst.msk [vmem:[%s229 + $0x38] sm:$0xff] %vm2720, %v2711
        %2729 = vst.msk [vmem:[%s229 + $0x40] sm:$0xff] %vm2720, %v2712
        %2730 = vst.msk [vmem:[%s229 + $0x48] sm:$0xff] %vm2720, %v2713
        %2731 = vst.msk [vmem:[%s229 + $0x50] sm:$0xff] %vm2720, %v2714
        %2732 = vst.msk [vmem:[%s229 + $0x58] sm:$0xff] %vm2720, %v2715
        %2733 = vst.msk [vmem:[%s229 + $0x60] sm:$0xff] %vm2720, %v2716
        %2734 = vst.msk [vmem:[%s229 + $0x68] sm:$0xff] %vm2720, %v2717
        %2735 = vst.msk [vmem:[%s229 + $0x70] sm:$0xff] %vm2720, %v2718
        %2736 = vst.msk [vmem:[%s229 + $0x78] sm:$0xff] %vm2720, %v2719
        %s2737 = sand.u32 %s111, 1
        %s2738 = scalar_lea.sflag [#allocation4], %s2737
        %s2739 = sand.u32 %s111, 1
        %s2740 = smul.addr %s2739, 128
        %s2741 = scalar_lea.vmem [#allocation8], %s2740
        // Predicated region
        $region45: #{upsample_block_x3.1} parent=31 // pred_check
          %p2742 = pneg %p121
        $region46: #{upsample_block_x3.1} parent=31 // pred_check_branch
          %2744 = sbr.rel (%p2742) target = $region48
        $region47: #{upsample_block_x3.1} parent=31 // pred_region
          %s2745 = smul.u32 8, %s26
          %s2747 = ssub.s32 2048, 2048
          %2748 = vsyncadd %s2738, %s2747
          %s2749 = smul.addr %s2745, 2
          %s2750 = smul.addr %s25, 32
          %s2751 = sadd.s32 %s2749, %s2750
          %s2752 = smul.addr %s2751, 128
          %s2753 = scalar_lea.hbm %s3, %s2752
          %s2754 = sshll.u32 %s2741, 4
          %s2755 = int_to_ptr.vmem [resolvable:$true] %s2754
          %2760 = dma.vmem_to_hbm [thread:$0]  %s2755, 2048, %s2753, %s2738, 128, 128, 8
        $region48: #{upsample_block_x3.1} parent=31 // pred_fallthru
          _
      $region32: #{upsample_block_x3.1} parent=5 // pred_fallthru
        _
      %p2761 = scmp.le.s32.totalorder 2, %s16
      // Predicated region
      $region49: #{upsample_block_x3.1} parent=5 // pred_check
        %p2762 = pneg %p2761
      $region50: #{upsample_block_x3.1} parent=5 // pred_check_branch
        %2764 = sbr.rel (%p2762) target = $region52
      $region51: #{upsample_block_x3.1} parent=5 // pred_region
        %s2765 = ssub.s32 %s16, 2
        // Predicated region
        $region53: #{upsample_block_x3.1} parent=51 // pred_check
          %p2766 = pneg %p127
        $region54: #{upsample_block_x3.1} parent=51 // pred_check_branch
          %2768 = sbr.rel (%p2766) target = $region56
        $region55: #{upsample_block_x3.1} parent=51 // pred_region
          %s2769 = sand.u32 %s112, 1
          %s2770 = scalar_lea.sflag [#allocation4], %s2769
          %s2771 = sand.u32 %s112, 1
          %s2772 = smul.addr %s2771, 128
          %s2773 = scalar_lea.vmem [#allocation8], %s2772
          %2774 = dma.done %s2770, 2048
        $region56: #{upsample_block_x3.1} parent=51 // pred_fallthru
          _
      $region52: #{upsample_block_x3.1} parent=5 // pred_fallthru
        _
    $region6: #{upsample_block_x3.1} parent=1 // loop_footer
      %s20 = sadd.s32 1, %s16
    $region7: #{upsample_block_x3.1} parent=1 // loop_footer_branch
      %15 = sbr.rel target = $region3
    $region8: #{upsample_block_x3.1} parent=1 // loop_exit
      _
    %2775 = vsyncpa [#allocation3], 1
    %s2776 = scalar_lea.sflag [#allocation3], 1
    %2777 = vsyncpa %s2776, 1
    %2778 = vsyncpa [#allocation6], 1
    %2779 = vsyncpa [#allocation4], 1
    %s2780 = scalar_lea.sflag [#allocation4], 1
    %2781 = vsyncpa %s2780, 1

</llo_original>
